<compile_context>
chip_gen: v5e
topology: v5e:2x2
jax: 0.10.0
libtpu: 0.0.40
codegen_flags: <defaults>
</compile_context>

<pallas_src>
import functools
import math

import jax
import jax.numpy as jnp
import numpy as np
from jax import lax
from jax.experimental import pallas as pl
from jax.experimental.pallas import tpu as pltpu

EPS = 1e-15


def _softmax_last(z):
    z = z - jnp.max(z, axis=-1, keepdims=True)
    z = jnp.exp(z)
    return z / jnp.sum(z, axis=-1, keepdims=True)


# --------------------------- single fused kernel ---------------------------------
def fused_forward_kernel(x_ref, amask_ref, ed_ref, scat_ref, adj_ref,
                         bng_ref, bnb_ref,
                         wqkvs_ref, bqkvs_ref, we_ref,
                         ws1_ref, bs1_ref, w2_ref, b2_ref,
                         ws2_ref, bs2_ref, w3_ref, b3_ref,
                         wl1_ref, bl1_ref, wro_ref, bro_ref,
                         o_ref):
    # ---- 1) BatchNorm1d (training-mode batch statistics) ----
    # TODO(synk): pass running_mean/running_var for eval()-mode parity.
    x = x_ref[...]                                                  # [N, Cin]
    mu = jnp.mean(x, axis=0, keepdims=True)
    var = jnp.mean((x - mu) ** 2, axis=0, keepdims=True)
    xn = (x - mu) * lax.rsqrt(var + 1e-5) * bng_ref[...] + bnb_ref[...]

    # ---- 2) TransformerConv (heads=1, edge_dim=De) as dense masked attention ----
    M = amask_ref[...]                                              # [N,N]; M[i,j]=1 iff edge j->i
    we = we_ref[...]                                                # [De,H]
    # packed q|k|v|skip projection: ONE MXU matmul, static slices are free views
    proj = jnp.dot(xn, wqkvs_ref[...], preferred_element_type=jnp.float32) + bqkvs_ref[...]
    H = proj.shape[1] // 4
    q = proj[:, 0 * H:1 * H]
    k = proj[:, 1 * H:2 * H]
    v = proj[:, 2 * H:3 * H]
    skip = proj[:, 3 * H:4 * H]

    # scores[i,j] = q_i . (k_j + W_e e_{j->i}) / sqrt(H)   (dot_general, no transposes)
    scores = lax.dot_general(q, k, (((1,), (1,)), ((), ())),
                             preferred_element_type=jnp.float32)    # [N,N]
    qe = lax.dot_general(q, we, (((1,), (1,)), ((), ())),
                         preferred_element_type=jnp.float32)        # [N,De]
    De = ed_ref.shape[0]
    ed = [ed_ref[d].astype(jnp.float32) for d in range(De)]         # bf16 planes -> f32
    for d in range(De):                                             # static unroll, De=5
        scores = scores + qe[:, d:d + 1] * ed[d]
    scores = scores * (1.0 / math.sqrt(H))

    sm = jnp.where(M > 0, scores, jnp.float32(-1e30))
    mx = jnp.max(sm, axis=1, keepdims=True)
    p = jnp.exp(sm - mx) * M
    den = jnp.sum(p, axis=1, keepdims=True)
    # exact reciprocal (parity); nodes with no incoming edges -> all-zero alpha row
    alpha = p / jnp.maximum(den, 1e-30)

    # out_i = sum_j alpha_ij (v_j + W_e e_{j->i}) + skip_i  -> ReLU
    msg = jnp.dot(alpha, v, preferred_element_type=jnp.float32)     # [N,H]
    ones_n = jnp.ones((M.shape[1], 1), jnp.float32)
    for d in range(De):
        # lane reduction over keys as an MXU ones-matvec (keeps it off the XLU,
        # no [De,N,N] f32 temporaries)
        col = jnp.dot(alpha * ed[d], ones_n, preferred_element_type=jnp.float32)  # [N,1]
        msg = msg + col * we[d:d + 1, :]
    x1 = jnp.maximum(msg + skip, 0.0)                               # [N,H]

    # ---- 3) pool-1 assignment hoisted: one matmul + one softmax in node order ----
    s1n = _softmax_last(jnp.dot(x1, ws1_ref[...],
                                preferred_element_type=jnp.float32) + bs1_ref[...])  # [N,K1]

    def mincut_pool(sb, xb, adjb):
        # S^T X and S^T A S via dot_general over the node axis (no transposes)
        xp = lax.dot_general(sb, xb, (((0,), (0,)), ((), ())),
                             preferred_element_type=jnp.float32)
        sta = lax.dot_general(sb, adjb, (((0,), (0,)), ((), ())),
                              preferred_element_type=jnp.float32)
        ap = jnp.dot(sta, sb, preferred_element_type=jnp.float32)
        K = ap.shape[0]
        ii = lax.broadcasted_iota(jnp.int32, (K, K), 0)
        jj = lax.broadcasted_iota(jnp.int32, (K, K), 1)
        ap = jnp.where(ii == jj, 0.0, ap)                           # zero the diagonal
        deg = jnp.sum(ap, axis=-1, keepdims=True)
        inv = lax.rsqrt(deg + EPS)                                  # single EUP rsqrt
        ap = ap * inv * inv.T                                       # symmetric degree-normalize
        # TODO(synk): mincut / orthogonality losses omitted — forward() does not
        # return them.
        return xp, ap

    def dense_graph_conv(xb, adjb, w_packed, bias):
        # DenseGraphConv as ONE matmul: [adj@x | x] @ [wrel ; wroot] + brel
        agg = jnp.dot(adjb, xb, preferred_element_type=jnp.float32)
        h = jnp.concatenate([agg, xb], axis=1)
        return jnp.dot(h, w_packed, preferred_element_type=jnp.float32) + bias

    B = scat_ref.shape[0]
    w2, b2 = w2_ref[...], b2_ref[...]
    w3, b3 = w3_ref[...], b3_ref[...]

    # ---- 4) per-graph pooled tail (B tiny & static: unrolled; 2D MXU ops only) ----
    h2_list, a1_list = [], []
    for b in range(B):
        scat_b = scat_ref[b]                                        # [Nmax,N] 0/1 scatter
        # to_dense_batch as a matmul; padded rows come out exactly zero, which is
        # identical to PyG's x*mask / s*mask in the masked mincut pool.
        xb = jnp.dot(scat_b, x1, preferred_element_type=jnp.float32)   # [Nmax,H]
        sb = jnp.dot(scat_b, s1n, preferred_element_type=jnp.float32)  # [Nmax,K1]
        xp1, ap1 = mincut_pool(sb, xb, adj_ref[b])
        h2_list.append(jnp.maximum(dense_graph_conv(xp1, ap1, w2, b2), 0.0))
        a1_list.append(ap1)

    # pool-2 assignment hoisted across the batch: one matmul + one softmax
    K1 = h2_list[0].shape[0]
    h2_all = jnp.concatenate(h2_list, axis=0)                       # [B*K1, hidden]
    s2_all = _softmax_last(jnp.dot(h2_all, ws2_ref[...],
                                   preferred_element_type=jnp.float32) + bs2_ref[...])

    g_list = []
    for b in range(B):
        s2b = s2_all[b * K1:(b + 1) * K1, :]
        xp2, ap2 = mincut_pool(s2b, h2_list[b], a1_list[b])
        h3 = dense_graph_conv(xp2, ap2, w3, b3)                     # conv3 (no relu)
        g_list.append(jnp.mean(h3, axis=0, keepdims=True))          # mean over nodes

    # ---- 5) readout on the stacked [B, hidden] block; SINGLE output store ----
    g = jnp.concatenate(g_list, axis=0)                             # [B, hidden]
    h = jnp.maximum(jnp.dot(g, wl1_ref[...], preferred_element_type=jnp.float32)
                    + bl1_ref[...], 0.0)
    y = jax.nn.sigmoid(jnp.dot(h, wro_ref[...], preferred_element_type=jnp.float32)
                       + bro_ref[...])
    o_ref[...] = y                                                  # [B, out_channels]


# -------------------------------- model glue -------------------------------------
def init_linear(key, fan_in, fan_out, bias=True):
    k1, k2 = jax.random.split(key)
    w = jax.random.normal(k1, (fan_in, fan_out), jnp.float32) / np.sqrt(fan_in)
    if bias:
        return w, 0.1 * jax.random.normal(k2, (1, fan_out), jnp.float32)
    return w, None


@functools.partial(jax.jit, static_argnames=("n_per_graph",))
def model_forward(params, x, edge_index, edge_attr, batch, n_per_graph):
    N, Cin = x.shape
    B = len(n_per_graph)
    Nmax = int(max(n_per_graph))
    De = edge_attr.shape[1]
    src, dst = edge_index[0], edge_index[1]

    # Graph-structure-only dense tensors (depend only on edge_index/batch; in a
    # SHAP loop these are reusable across evaluations).
    # TODO(synk): at large N/E, build per-tile masks in-kernel from
    # scalar-prefetched edge lists (PrefetchScalarGridSpec), tile the key axis in
    # 128-multiples with generation-aware VMEM budgets, and add a "parallel"
    # query/batch grid axis so v7x's second TensorCore is used.
    attn_mask = jnp.zeros((N, N), jnp.float32).at[dst, src].set(1.0)
    edense = (jnp.zeros((De, N, N), jnp.float32)
              .at[:, dst, src].set(edge_attr.T)).astype(jnp.bfloat16)  # halve DMA bytes

    counts = jnp.array(n_per_graph, jnp.int32)
    starts = jnp.concatenate([jnp.zeros((1,), jnp.int32), jnp.cumsum(counts)[:-1]])
    local = jnp.arange(N, dtype=jnp.int32) - starts[batch]
    # to_dense_batch as a 0/1 scatter matrix -> a single MXU matmul in-kernel
    scat = (jnp.zeros((B, Nmax, N), jnp.float32)
            .at[batch, local, jnp.arange(N)].set(1.0))
    adj = (jnp.zeros((B, Nmax, Nmax), jnp.float32)
           .at[batch[src], local[src], local[dst]].add(1.0))

    # ---- weight packing (cuts MXU pushes 2-4x; done once under the same jit) ----
    c1 = params["conv1"]
    wqkvs = jnp.concatenate([c1["wq"], c1["wk"], c1["wv"], c1["wskip"]], axis=1)
    bqkvs = jnp.concatenate([c1["bq"], c1["bk"], c1["bv"], c1["bskip"]], axis=1)
    w2 = jnp.concatenate([params["conv2_wrel"], params["conv2_wroot"]], axis=0)
    w3 = jnp.concatenate([params["conv3_wrel"], params["conv3_wroot"]], axis=0)

    H = c1["wq"].shape[1]
    K1 = params["mlp1_w"].shape[1]
    out_c = params["readout1_w"].shape[1]

    flops = int(2 * N * Cin * 4 * H + 4 * N * N * H + 4 * De * N * N
                + 2 * N * De * H + 2 * N * H * K1
                + B * (2 * Nmax * N * (H + K1) + 8 * Nmax * Nmax * H) + 1024)
    cost = pl.CostEstimate(
        flops=flops,
        transcendentals=int(N * N + N * K1 + 8 * B + B * out_c),
        bytes_accessed=int(4 * (N * Cin + N * N + B * Nmax * (N + Nmax))
                           + 2 * De * N * N + 4 * B * out_c + 4096))

    out = pl.pallas_call(
        fused_forward_kernel,
        out_shape=jax.ShapeDtypeStruct((B, out_c), jnp.float32),
        compiler_params=pltpu.CompilerParams(vmem_limit_bytes=32 * 1024 * 1024),
        cost_estimate=cost,
    )(x, attn_mask, edense, scat, adj,
      params["bn_gamma"], params["bn_beta"],
      wqkvs, bqkvs, c1["we"],
      params["mlp1_w"], params["mlp1_b"], w2, params["conv2_brel"],
      params["mlp2_w"], params["mlp2_b"], w3, params["conv3_brel"],
      params["lin1_w"], params["lin1_b"],
      params["readout1_w"], params["readout1_b"])
    return jnp.squeeze(out, axis=-1)


if __name__ == "__main__":
    in_channels, hidden_channels, head = 4, 8, 1
    average_nodes, out_channels = 8, 1
    edge_dim = 5
    num_nodes1 = math.ceil(0.5 * average_nodes)        # mlp1 -> 4 clusters
    num_nodes2 = math.ceil(0.5 * num_nodes1)           # mlp2 -> 2 clusters

    key = jax.random.PRNGKey(0)
    keys = jax.random.split(key, 20)

    params = {}
    params["bn_gamma"] = 1.0 + 0.1 * jax.random.normal(keys[0], (1, in_channels), jnp.float32)
    params["bn_beta"] = 0.1 * jax.random.normal(keys[1], (1, in_channels), jnp.float32)

    wq, bq = init_linear(keys[2], in_channels, hidden_channels * head)
    wk, bk = init_linear(keys[3], in_channels, hidden_channels * head)
    wv, bv = init_linear(keys[4], in_channels, hidden_channels * head)
    we, _ = init_linear(keys[5], edge_dim, hidden_channels * head, bias=False)
    wskip, bskip = init_linear(keys[6], in_channels, hidden_channels * head)
    params["conv1"] = dict(wq=wq, bq=bq, wk=wk, bk=bk, wv=wv, bv=bv, we=we,
                           wskip=wskip, bskip=bskip)

    params["mlp1_w"], params["mlp1_b"] = init_linear(keys[7], hidden_channels * head, num_nodes1)
    params["conv2_wrel"], params["conv2_brel"] = init_linear(keys[8], hidden_channels * head, hidden_channels)
    params["conv2_wroot"], _ = init_linear(keys[9], hidden_channels * head, hidden_channels, bias=False)
    params["mlp2_w"], params["mlp2_b"] = init_linear(keys[10], hidden_channels, num_nodes2)
    params["conv3_wrel"], params["conv3_brel"] = init_linear(keys[11], hidden_channels, hidden_channels)
    params["conv3_wroot"], _ = init_linear(keys[12], hidden_channels, hidden_channels, bias=False)
    params["lin1_w"], params["lin1_b"] = init_linear(keys[13], hidden_channels, hidden_channels)
    params["readout1_w"], params["readout1_b"] = init_linear(keys[14], hidden_channels, out_channels)

    # Synthetic batch of 2 graphs (6 + 5 nodes), undirected ring topologies.
    n_per_graph = (6, 5)
    N = sum(n_per_graph)
    edges = []
    for i in range(6):
        j = (i + 1) % 6
        edges.append((i, j)); edges.append((j, i))
    for i in range(5):
        a = 6 + i; b = 6 + (i + 1) % 5
        edges.append((a, b)); edges.append((b, a))
    edge_index = jnp.array(edges, dtype=jnp.int32).T            # [2, E]
    E = edge_index.shape[1]
    edge_attr = jax.random.normal(keys[15], (E, edge_dim), jnp.float32)
    batch = jnp.array([0] * 6 + [1] * 5, jnp.int32)
    x = jax.random.normal(keys[16], (N, in_channels), jnp.float32)

    out = model_forward(params, x, edge_index, edge_attr, batch,
                        n_per_graph=n_per_graph)
    out = jax.block_until_ready(out)
    assert out.shape == (len(n_per_graph),)
    assert bool(jnp.all(jnp.isfinite(out)))
    assert bool(jnp.all((out >= 0.0) & (out <= 1.0)))
    print("KERNEL_OK")
</pallas_src>

<mosaic_0001>
module attributes {stable_mosaic.version = 11 : i64} {
  func.func @fused_forward_kernel(%arg0: memref<11x4xf32, #tpu.memory_space<vmem>>, %arg1: memref<11x11xf32, #tpu.memory_space<vmem>>, %arg2: memref<5x11x11xbf16, #tpu.memory_space<vmem>>, %arg3: memref<2x6x11xf32, #tpu.memory_space<vmem>>, %arg4: memref<2x6x6xf32, #tpu.memory_space<vmem>>, %arg5: memref<1x4xf32, #tpu.memory_space<vmem>>, %arg6: memref<1x4xf32, #tpu.memory_space<vmem>>, %arg7: memref<4x32xf32, #tpu.memory_space<vmem>>, %arg8: memref<1x32xf32, #tpu.memory_space<vmem>>, %arg9: memref<5x8xf32, #tpu.memory_space<vmem>>, %arg10: memref<8x4xf32, #tpu.memory_space<vmem>>, %arg11: memref<1x4xf32, #tpu.memory_space<vmem>>, %arg12: memref<16x8xf32, #tpu.memory_space<vmem>>, %arg13: memref<1x8xf32, #tpu.memory_space<vmem>>, %arg14: memref<8x2xf32, #tpu.memory_space<vmem>>, %arg15: memref<1x2xf32, #tpu.memory_space<vmem>>, %arg16: memref<16x8xf32, #tpu.memory_space<vmem>>, %arg17: memref<1x8xf32, #tpu.memory_space<vmem>>, %arg18: memref<8x8xf32, #tpu.memory_space<vmem>>, %arg19: memref<1x8xf32, #tpu.memory_space<vmem>>, %arg20: memref<8x1xf32, #tpu.memory_space<vmem>>, %arg21: memref<1x1xf32, #tpu.memory_space<vmem>>, %arg22: memref<2x1xf32, #tpu.memory_space<vmem>>) attributes {dimension_semantics = [], scalar_prefetch = 0 : i64, scratch_operands = 0 : i64, tpu.core_type = #tpu.core_type<tc>} {
    %c0 = arith.constant 0 : index
    %c0_0 = arith.constant 0 : index
    %0 = vector.load %arg0[%c0, %c0_0] : memref<11x4xf32, #tpu.memory_space<vmem>>, vector<11x4xf32>
    %cst = arith.constant dense<0.000000e+00> : vector<4xf32>
    %1 = vector.multi_reduction <add>, %0, %cst [0] : vector<11x4xf32> to vector<4xf32>
    %2 = vector.shape_cast %1 : vector<4xf32> to vector<1x4xf32>
    %cst_1 = arith.constant 1.100000e+01 : f32
    %3 = vector.broadcast %cst_1 : f32 to vector<1x4xf32>
    %4 = arith.divf %2, %3 : vector<1x4xf32>
    %5 = vector.broadcast %4 : vector<1x4xf32> to vector<11x4xf32>
    %6 = arith.subf %0, %5 : vector<11x4xf32>
    %7 = arith.mulf %6, %6 : vector<11x4xf32>
    %cst_2 = arith.constant dense<0.000000e+00> : vector<4xf32>
    %8 = vector.multi_reduction <add>, %7, %cst_2 [0] : vector<11x4xf32> to vector<4xf32>
    %9 = vector.shape_cast %8 : vector<4xf32> to vector<1x4xf32>
    %cst_3 = arith.constant 1.100000e+01 : f32
    %10 = vector.broadcast %cst_3 : f32 to vector<1x4xf32>
    %11 = arith.divf %9, %10 : vector<1x4xf32>
    %12 = vector.broadcast %4 : vector<1x4xf32> to vector<11x4xf32>
    %13 = arith.subf %0, %12 : vector<11x4xf32>
    %cst_4 = arith.constant 9.99999974E-6 : f32
    %14 = vector.broadcast %cst_4 : f32 to vector<1x4xf32>
    %15 = arith.addf %11, %14 : vector<1x4xf32>
    %16 = math.rsqrt %15 : vector<1x4xf32>
    %17 = vector.broadcast %16 : vector<1x4xf32> to vector<11x4xf32>
    %18 = arith.mulf %13, %17 : vector<11x4xf32>
    %c0_5 = arith.constant 0 : index
    %c0_6 = arith.constant 0 : index
    %19 = vector.load %arg5[%c0_5, %c0_6] : memref<1x4xf32, #tpu.memory_space<vmem>>, vector<1x4xf32>
    %20 = vector.broadcast %19 : vector<1x4xf32> to vector<11x4xf32>
    %21 = arith.mulf %18, %20 : vector<11x4xf32>
    %c0_7 = arith.constant 0 : index
    %c0_8 = arith.constant 0 : index
    %22 = vector.load %arg6[%c0_7, %c0_8] : memref<1x4xf32, #tpu.memory_space<vmem>>, vector<1x4xf32>
    %23 = vector.broadcast %22 : vector<1x4xf32> to vector<11x4xf32>
    %24 = arith.addf %21, %23 : vector<11x4xf32>
    %c0_9 = arith.constant 0 : index
    %c0_10 = arith.constant 0 : index
    %25 = vector.load %arg1[%c0_9, %c0_10] : memref<11x11xf32, #tpu.memory_space<vmem>>, vector<11x11xf32>
    %c0_11 = arith.constant 0 : index
    %c0_12 = arith.constant 0 : index
    %26 = vector.load %arg9[%c0_11, %c0_12] : memref<5x8xf32, #tpu.memory_space<vmem>>, vector<5x8xf32>
    %c0_13 = arith.constant 0 : index
    %c0_14 = arith.constant 0 : index
    %27 = vector.load %arg7[%c0_13, %c0_14] : memref<4x32xf32, #tpu.memory_space<vmem>>, vector<4x32xf32>
    %cst_15 = arith.constant dense<0.000000e+00> : vector<11x32xf32>
    %28 = tpu.matmul %24, %27, %cst_15 {dimension_numbers = #tpu.dot_dimension_numbers<[1], [0], [0], [1], [0, 0, 1, 1], [], []>} : vector<11x4xf32>, vector<4x32xf32>, vector<11x32xf32> -> vector<11x32xf32>
    %c0_16 = arith.constant 0 : index
    %c0_17 = arith.constant 0 : index
    %29 = vector.load %arg8[%c0_16, %c0_17] : memref<1x32xf32, #tpu.memory_space<vmem>>, vector<1x32xf32>
    %30 = vector.broadcast %29 : vector<1x32xf32> to vector<11x32xf32>
    %31 = arith.addf %28, %30 : vector<11x32xf32>
    %32 = vector.extract_strided_slice %31 {offsets = [0, 0], sizes = [11, 8], strides = [1, 1]} : vector<11x32xf32> to vector<11x8xf32>
    %33 = vector.extract_strided_slice %31 {offsets = [0, 8], sizes = [11, 8], strides = [1, 1]} : vector<11x32xf32> to vector<11x8xf32>
    %34 = vector.extract_strided_slice %31 {offsets = [0, 16], sizes = [11, 8], strides = [1, 1]} : vector<11x32xf32> to vector<11x8xf32>
    %35 = vector.extract_strided_slice %31 {offsets = [0, 24], sizes = [11, 8], strides = [1, 1]} : vector<11x32xf32> to vector<11x8xf32>
    %cst_18 = arith.constant dense<0.000000e+00> : vector<11x11xf32>
    %36 = tpu.matmul %32, %33, %cst_18 {dimension_numbers = #tpu.dot_dimension_numbers<[1], [1], [0], [0], [0, 0, 1, 0], [], []>} : vector<11x8xf32>, vector<11x8xf32>, vector<11x11xf32> -> vector<11x11xf32>
    %cst_19 = arith.constant dense<0.000000e+00> : vector<11x5xf32>
    %37 = tpu.matmul %32, %26, %cst_19 {dimension_numbers = #tpu.dot_dimension_numbers<[1], [1], [0], [0], [0, 0, 1, 0], [], []>} : vector<11x8xf32>, vector<5x8xf32>, vector<11x5xf32> -> vector<11x5xf32>
    %c0_20 = arith.constant 0 : index
    %c0_21 = arith.constant 0 : index
    %c0_22 = arith.constant 0 : index
    %38 = vector.load %arg2[%c0_20, %c0_21, %c0_22] : memref<5x11x11xbf16, #tpu.memory_space<vmem>>, vector<1x11x11xbf16>
    %39 = vector.shape_cast %38 : vector<1x11x11xbf16> to vector<11x11xbf16>
    %40 = arith.extf %39 : vector<11x11xbf16> to vector<11x11xf32>
    %c1 = arith.constant 1 : index
    %c0_23 = arith.constant 0 : index
    %c0_24 = arith.constant 0 : index
    %41 = vector.load %arg2[%c1, %c0_23, %c0_24] : memref<5x11x11xbf16, #tpu.memory_space<vmem>>, vector<1x11x11xbf16>
    %42 = vector.shape_cast %41 : vector<1x11x11xbf16> to vector<11x11xbf16>
    %43 = arith.extf %42 : vector<11x11xbf16> to vector<11x11xf32>
    %c2 = arith.constant 2 : index
    %c0_25 = arith.constant 0 : index
    %c0_26 = arith.constant 0 : index
    %44 = vector.load %arg2[%c2, %c0_25, %c0_26] : memref<5x11x11xbf16, #tpu.memory_space<vmem>>, vector<1x11x11xbf16>
    %45 = vector.shape_cast %44 : vector<1x11x11xbf16> to vector<11x11xbf16>
    %46 = arith.extf %45 : vector<11x11xbf16> to vector<11x11xf32>
    %c3 = arith.constant 3 : index
    %c0_27 = arith.constant 0 : index
    %c0_28 = arith.constant 0 : index
    %47 = vector.load %arg2[%c3, %c0_27, %c0_28] : memref<5x11x11xbf16, #tpu.memory_space<vmem>>, vector<1x11x11xbf16>
    %48 = vector.shape_cast %47 : vector<1x11x11xbf16> to vector<11x11xbf16>
    %49 = arith.extf %48 : vector<11x11xbf16> to vector<11x11xf32>
    %c4 = arith.constant 4 : index
    %c0_29 = arith.constant 0 : index
    %c0_30 = arith.constant 0 : index
    %50 = vector.load %arg2[%c4, %c0_29, %c0_30] : memref<5x11x11xbf16, #tpu.memory_space<vmem>>, vector<1x11x11xbf16>
    %51 = vector.shape_cast %50 : vector<1x11x11xbf16> to vector<11x11xbf16>
    %52 = arith.extf %51 : vector<11x11xbf16> to vector<11x11xf32>
    %53 = vector.extract_strided_slice %37 {offsets = [0, 0], sizes = [11, 1], strides = [1, 1]} : vector<11x5xf32> to vector<11x1xf32>
    %54 = vector.broadcast %53 : vector<11x1xf32> to vector<11x11xf32>
    %55 = arith.mulf %54, %40 : vector<11x11xf32>
    %56 = arith.addf %36, %55 : vector<11x11xf32>
    %57 = vector.extract_strided_slice %37 {offsets = [0, 1], sizes = [11, 1], strides = [1, 1]} : vector<11x5xf32> to vector<11x1xf32>
    %58 = vector.broadcast %57 : vector<11x1xf32> to vector<11x11xf32>
    %59 = arith.mulf %58, %43 : vector<11x11xf32>
    %60 = arith.addf %56, %59 : vector<11x11xf32>
    %61 = vector.extract_strided_slice %37 {offsets = [0, 2], sizes = [11, 1], strides = [1, 1]} : vector<11x5xf32> to vector<11x1xf32>
    %62 = vector.broadcast %61 : vector<11x1xf32> to vector<11x11xf32>
    %63 = arith.mulf %62, %46 : vector<11x11xf32>
    %64 = arith.addf %60, %63 : vector<11x11xf32>
    %65 = vector.extract_strided_slice %37 {offsets = [0, 3], sizes = [11, 1], strides = [1, 1]} : vector<11x5xf32> to vector<11x1xf32>
    %66 = vector.broadcast %65 : vector<11x1xf32> to vector<11x11xf32>
    %67 = arith.mulf %66, %49 : vector<11x11xf32>
    %68 = arith.addf %64, %67 : vector<11x11xf32>
    %69 = vector.extract_strided_slice %37 {offsets = [0, 4], sizes = [11, 1], strides = [1, 1]} : vector<11x5xf32> to vector<11x1xf32>
    %70 = vector.broadcast %69 : vector<11x1xf32> to vector<11x11xf32>
    %71 = arith.mulf %70, %52 : vector<11x11xf32>
    %72 = arith.addf %68, %71 : vector<11x11xf32>
    %cst_31 = arith.constant 0.353553385 : f32
    %73 = vector.broadcast %cst_31 : f32 to vector<11x11xf32>
    %74 = arith.mulf %72, %73 : vector<11x11xf32>
    %cst_32 = arith.constant 0.000000e+00 : f32
    %75 = vector.broadcast %cst_32 : f32 to vector<11x11xf32>
    %76 = arith.cmpf ogt, %25, %75 : vector<11x11xf32>
    %cst_33 = arith.constant -1.000000e+30 : f32
    %77 = vector.broadcast %cst_33 : f32 to vector<11x11xf32>
    %78 = arith.select %76, %74, %77 : vector<11x11xi1>, vector<11x11xf32>
    %cst_34 = arith.constant dense<0xFF800000> : vector<11xf32>
    %79 = vector.multi_reduction <maximumf>, %78, %cst_34 [1] : vector<11x11xf32> to vector<11xf32>
    %80 = vector.shape_cast %79 : vector<11xf32> to vector<11x1xf32>
    %81 = vector.broadcast %80 : vector<11x1xf32> to vector<11x11xf32>
    %82 = arith.subf %78, %81 : vector<11x11xf32>
    %83 = math.exp %82 : vector<11x11xf32>
    %84 = arith.mulf %83, %25 : vector<11x11xf32>
    %cst_35 = arith.constant dense<0.000000e+00> : vector<11xf32>
    %85 = vector.multi_reduction <add>, %84, %cst_35 [1] : vector<11x11xf32> to vector<11xf32>
    %86 = vector.shape_cast %85 : vector<11xf32> to vector<11x1xf32>
    %cst_36 = arith.constant 1.000000e-30 : f32
    %87 = vector.broadcast %cst_36 : f32 to vector<11x1xf32>
    %88 = arith.maximumf %86, %87 : vector<11x1xf32>
    %89 = vector.broadcast %88 : vector<11x1xf32> to vector<11x11xf32>
    %90 = arith.divf %84, %89 : vector<11x11xf32>
    %cst_37 = arith.constant dense<0.000000e+00> : vector<11x8xf32>
    %91 = tpu.matmul %90, %34, %cst_37 {dimension_numbers = #tpu.dot_dimension_numbers<[1], [0], [0], [1], [0, 0, 1, 1], [], []>} : vector<11x11xf32>, vector<11x8xf32>, vector<11x8xf32> -> vector<11x8xf32>
    %cst_38 = arith.constant 1.000000e+00 : f32
    %92 = vector.broadcast %cst_38 : f32 to vector<11x1xf32>
    %93 = arith.mulf %90, %40 : vector<11x11xf32>
    %cst_39 = arith.constant dense<0.000000e+00> : vector<11x1xf32>
    %94 = tpu.matmul %93, %92, %cst_39 {dimension_numbers = #tpu.dot_dimension_numbers<[1], [0], [0], [1], [0, 0, 1, 1], [], []>} : vector<11x11xf32>, vector<11x1xf32>, vector<11x1xf32> -> vector<11x1xf32>
    %95 = vector.extract_strided_slice %26 {offsets = [0, 0], sizes = [1, 8], strides = [1, 1]} : vector<5x8xf32> to vector<1x8xf32>
    %96 = vector.broadcast %94 : vector<11x1xf32> to vector<11x8xf32>
    %97 = vector.broadcast %95 : vector<1x8xf32> to vector<11x8xf32>
    %98 = arith.mulf %96, %97 : vector<11x8xf32>
    %99 = arith.addf %91, %98 : vector<11x8xf32>
    %100 = arith.mulf %90, %43 : vector<11x11xf32>
    %cst_40 = arith.constant dense<0.000000e+00> : vector<11x1xf32>
    %101 = tpu.matmul %100, %92, %cst_40 {dimension_numbers = #tpu.dot_dimension_numbers<[1], [0], [0], [1], [0, 0, 1, 1], [], []>} : vector<11x11xf32>, vector<11x1xf32>, vector<11x1xf32> -> vector<11x1xf32>
    %102 = vector.extract_strided_slice %26 {offsets = [1, 0], sizes = [1, 8], strides = [1, 1]} : vector<5x8xf32> to vector<1x8xf32>
    %103 = vector.broadcast %101 : vector<11x1xf32> to vector<11x8xf32>
    %104 = vector.broadcast %102 : vector<1x8xf32> to vector<11x8xf32>
    %105 = arith.mulf %103, %104 : vector<11x8xf32>
    %106 = arith.addf %99, %105 : vector<11x8xf32>
    %107 = arith.mulf %90, %46 : vector<11x11xf32>
    %cst_41 = arith.constant dense<0.000000e+00> : vector<11x1xf32>
    %108 = tpu.matmul %107, %92, %cst_41 {dimension_numbers = #tpu.dot_dimension_numbers<[1], [0], [0], [1], [0, 0, 1, 1], [], []>} : vector<11x11xf32>, vector<11x1xf32>, vector<11x1xf32> -> vector<11x1xf32>
    %109 = vector.extract_strided_slice %26 {offsets = [2, 0], sizes = [1, 8], strides = [1, 1]} : vector<5x8xf32> to vector<1x8xf32>
    %110 = vector.broadcast %108 : vector<11x1xf32> to vector<11x8xf32>
    %111 = vector.broadcast %109 : vector<1x8xf32> to vector<11x8xf32>
    %112 = arith.mulf %110, %111 : vector<11x8xf32>
    %113 = arith.addf %106, %112 : vector<11x8xf32>
    %114 = arith.mulf %90, %49 : vector<11x11xf32>
    %cst_42 = arith.constant dense<0.000000e+00> : vector<11x1xf32>
    %115 = tpu.matmul %114, %92, %cst_42 {dimension_numbers = #tpu.dot_dimension_numbers<[1], [0], [0], [1], [0, 0, 1, 1], [], []>} : vector<11x11xf32>, vector<11x1xf32>, vector<11x1xf32> -> vector<11x1xf32>
    %116 = vector.extract_strided_slice %26 {offsets = [3, 0], sizes = [1, 8], strides = [1, 1]} : vector<5x8xf32> to vector<1x8xf32>
    %117 = vector.broadcast %115 : vector<11x1xf32> to vector<11x8xf32>
    %118 = vector.broadcast %116 : vector<1x8xf32> to vector<11x8xf32>
    %119 = arith.mulf %117, %118 : vector<11x8xf32>
    %120 = arith.addf %113, %119 : vector<11x8xf32>
    %121 = arith.mulf %90, %52 : vector<11x11xf32>
    %cst_43 = arith.constant dense<0.000000e+00> : vector<11x1xf32>
    %122 = tpu.matmul %121, %92, %cst_43 {dimension_numbers = #tpu.dot_dimension_numbers<[1], [0], [0], [1], [0, 0, 1, 1], [], []>} : vector<11x11xf32>, vector<11x1xf32>, vector<11x1xf32> -> vector<11x1xf32>
    %123 = vector.extract_strided_slice %26 {offsets = [4, 0], sizes = [1, 8], strides = [1, 1]} : vector<5x8xf32> to vector<1x8xf32>
    %124 = vector.broadcast %122 : vector<11x1xf32> to vector<11x8xf32>
    %125 = vector.broadcast %123 : vector<1x8xf32> to vector<11x8xf32>
    %126 = arith.mulf %124, %125 : vector<11x8xf32>
    %127 = arith.addf %120, %126 : vector<11x8xf32>
    %128 = arith.addf %127, %35 : vector<11x8xf32>
    %cst_44 = arith.constant 0.000000e+00 : f32
    %129 = vector.broadcast %cst_44 : f32 to vector<11x8xf32>
    %130 = arith.maximumf %128, %129 : vector<11x8xf32>
    %c0_45 = arith.constant 0 : index
    %c0_46 = arith.constant 0 : index
    %131 = vector.load %arg10[%c0_45, %c0_46] : memref<8x4xf32, #tpu.memory_space<vmem>>, vector<8x4xf32>
    %cst_47 = arith.constant dense<0.000000e+00> : vector<11x4xf32>
    %132 = tpu.matmul %130, %131, %cst_47 {dimension_numbers = #tpu.dot_dimension_numbers<[1], [0], [0], [1], [0, 0, 1, 1], [], []>} : vector<11x8xf32>, vector<8x4xf32>, vector<11x4xf32> -> vector<11x4xf32>
    %c0_48 = arith.constant 0 : index
    %c0_49 = arith.constant 0 : index
    %133 = vector.load %arg11[%c0_48, %c0_49] : memref<1x4xf32, #tpu.memory_space<vmem>>, vector<1x4xf32>
    %134 = vector.broadcast %133 : vector<1x4xf32> to vector<11x4xf32>
    %135 = arith.addf %132, %134 : vector<11x4xf32>
    %cst_50 = arith.constant dense<0xFF800000> : vector<11xf32>
    %136 = vector.multi_reduction <maximumf>, %135, %cst_50 [1] : vector<11x4xf32> to vector<11xf32>
    %137 = vector.shape_cast %136 : vector<11xf32> to vector<11x1xf32>
    %138 = vector.broadcast %137 : vector<11x1xf32> to vector<11x4xf32>
    %139 = arith.subf %135, %138 : vector<11x4xf32>
    %140 = math.exp %139 : vector<11x4xf32>
    %cst_51 = arith.constant dense<0.000000e+00> : vector<11xf32>
    %141 = vector.multi_reduction <add>, %140, %cst_51 [1] : vector<11x4xf32> to vector<11xf32>
    %142 = vector.shape_cast %141 : vector<11xf32> to vector<11x1xf32>
    %143 = vector.broadcast %142 : vector<11x1xf32> to vector<11x4xf32>
    %144 = arith.divf %140, %143 : vector<11x4xf32>
    %c0_52 = arith.constant 0 : index
    %c0_53 = arith.constant 0 : index
    %145 = vector.load %arg12[%c0_52, %c0_53] : memref<16x8xf32, #tpu.memory_space<vmem>>, vector<16x8xf32>
    %c0_54 = arith.constant 0 : index
    %c0_55 = arith.constant 0 : index
    %146 = vector.load %arg13[%c0_54, %c0_55] : memref<1x8xf32, #tpu.memory_space<vmem>>, vector<1x8xf32>
    %c0_56 = arith.constant 0 : index
    %c0_57 = arith.constant 0 : index
    %147 = vector.load %arg16[%c0_56, %c0_57] : memref<16x8xf32, #tpu.memory_space<vmem>>, vector<16x8xf32>
    %c0_58 = arith.constant 0 : index
    %c0_59 = arith.constant 0 : index
    %148 = vector.load %arg17[%c0_58, %c0_59] : memref<1x8xf32, #tpu.memory_space<vmem>>, vector<1x8xf32>
    %c0_60 = arith.constant 0 : index
    %c0_61 = arith.constant 0 : index
    %c0_62 = arith.constant 0 : index
    %149 = vector.load %arg3[%c0_60, %c0_61, %c0_62] : memref<2x6x11xf32, #tpu.memory_space<vmem>>, vector<1x6x11xf32>
    %150 = vector.shape_cast %149 : vector<1x6x11xf32> to vector<6x11xf32>
    %cst_63 = arith.constant dense<0.000000e+00> : vector<6x8xf32>
    %151 = tpu.matmul %150, %130, %cst_63 {dimension_numbers = #tpu.dot_dimension_numbers<[1], [0], [0], [1], [0, 0, 1, 1], [], []>} : vector<6x11xf32>, vector<11x8xf32>, vector<6x8xf32> -> vector<6x8xf32>
    %cst_64 = arith.constant dense<0.000000e+00> : vector<6x4xf32>
    %152 = tpu.matmul %150, %144, %cst_64 {dimension_numbers = #tpu.dot_dimension_numbers<[1], [0], [0], [1], [0, 0, 1, 1], [], []>} : vector<6x11xf32>, vector<11x4xf32>, vector<6x4xf32> -> vector<6x4xf32>
    %c0_65 = arith.constant 0 : index
    %c0_66 = arith.constant 0 : index
    %c0_67 = arith.constant 0 : index
    %153 = vector.load %arg4[%c0_65, %c0_66, %c0_67] : memref<2x6x6xf32, #tpu.memory_space<vmem>>, vector<1x6x6xf32>
    %154 = vector.shape_cast %153 : vector<1x6x6xf32> to vector<6x6xf32>
    %cst_68 = arith.constant dense<0.000000e+00> : vector<4x8xf32>
    %155 = tpu.matmul %152, %151, %cst_68 {dimension_numbers = #tpu.dot_dimension_numbers<[0], [0], [1], [1], [0, 1, 1, 1], [], []>} : vector<6x4xf32>, vector<6x8xf32>, vector<4x8xf32> -> vector<4x8xf32>
    %cst_69 = arith.constant dense<0.000000e+00> : vector<4x6xf32>
    %156 = tpu.matmul %152, %154, %cst_69 {dimension_numbers = #tpu.dot_dimension_numbers<[0], [0], [1], [1], [0, 1, 1, 1], [], []>} : vector<6x4xf32>, vector<6x6xf32>, vector<4x6xf32> -> vector<4x6xf32>
    %cst_70 = arith.constant dense<0.000000e+00> : vector<4x4xf32>
    %157 = tpu.matmul %156, %152, %cst_70 {dimension_numbers = #tpu.dot_dimension_numbers<[1], [0], [0], [1], [0, 0, 1, 1], [], []>} : vector<4x6xf32>, vector<6x4xf32>, vector<4x4xf32> -> vector<4x4xf32>
    %158 = tpu.iota {dimensions = array<i32: 0>} : vector<4x4xi32>
    %159 = tpu.iota {dimensions = array<i32: 1>} : vector<4x4xi32>
    %160 = arith.cmpi eq, %158, %159 : vector<4x4xi32>
    %cst_71 = arith.constant 0.000000e+00 : f32
    %161 = vector.broadcast %cst_71 : f32 to vector<4x4xf32>
    %162 = arith.select %160, %161, %157 : vector<4x4xi1>, vector<4x4xf32>
    %cst_72 = arith.constant dense<0.000000e+00> : vector<4xf32>
    %163 = vector.multi_reduction <add>, %162, %cst_72 [1] : vector<4x4xf32> to vector<4xf32>
    %164 = vector.shape_cast %163 : vector<4xf32> to vector<4x1xf32>
    %cst_73 = arith.constant 1.000000e-15 : f32
    %165 = vector.broadcast %cst_73 : f32 to vector<4x1xf32>
    %166 = arith.addf %164, %165 : vector<4x1xf32>
    %167 = math.rsqrt %166 : vector<4x1xf32>
    %168 = vector.broadcast %167 : vector<4x1xf32> to vector<4x4xf32>
    %169 = arith.mulf %162, %168 : vector<4x4xf32>
    %170 = tpu.transpose %167, [1, 0] : vector<4x1xf32> -> vector<1x4xf32>
    %171 = vector.broadcast %170 : vector<1x4xf32> to vector<4x4xf32>
    %172 = arith.mulf %169, %171 : vector<4x4xf32>
    %cst_74 = arith.constant dense<0.000000e+00> : vector<4x8xf32>
    %173 = tpu.matmul %172, %155, %cst_74 {dimension_numbers = #tpu.dot_dimension_numbers<[1], [0], [0], [1], [0, 0, 1, 1], [], []>} : vector<4x4xf32>, vector<4x8xf32>, vector<4x8xf32> -> vector<4x8xf32>
    %174 = tpu.concatenate %173, %155 in 1 : vector<4x8xf32>, vector<4x8xf32> -> vector<4x16xf32>
    %cst_75 = arith.constant dense<0.000000e+00> : vector<4x8xf32>
    %175 = tpu.matmul %174, %145, %cst_75 {dimension_numbers = #tpu.dot_dimension_numbers<[1], [0], [0], [1], [0, 0, 1, 1], [], []>} : vector<4x16xf32>, vector<16x8xf32>, vector<4x8xf32> -> vector<4x8xf32>
    %176 = vector.broadcast %146 : vector<1x8xf32> to vector<4x8xf32>
    %177 = arith.addf %175, %176 : vector<4x8xf32>
    %cst_76 = arith.constant 0.000000e+00 : f32
    %178 = vector.broadcast %cst_76 : f32 to vector<4x8xf32>
    %179 = arith.maximumf %177, %178 : vector<4x8xf32>
    %c1_77 = arith.constant 1 : index
    %c0_78 = arith.constant 0 : index
    %c0_79 = arith.constant 0 : index
    %180 = vector.load %arg3[%c1_77, %c0_78, %c0_79] : memref<2x6x11xf32, #tpu.memory_space<vmem>>, vector<1x6x11xf32>
    %181 = vector.shape_cast %180 : vector<1x6x11xf32> to vector<6x11xf32>
    %cst_80 = arith.constant dense<0.000000e+00> : vector<6x8xf32>
    %182 = tpu.matmul %181, %130, %cst_80 {dimension_numbers = #tpu.dot_dimension_numbers<[1], [0], [0], [1], [0, 0, 1, 1], [], []>} : vector<6x11xf32>, vector<11x8xf32>, vector<6x8xf32> -> vector<6x8xf32>
    %cst_81 = arith.constant dense<0.000000e+00> : vector<6x4xf32>
    %183 = tpu.matmul %181, %144, %cst_81 {dimension_numbers = #tpu.dot_dimension_numbers<[1], [0], [0], [1], [0, 0, 1, 1], [], []>} : vector<6x11xf32>, vector<11x4xf32>, vector<6x4xf32> -> vector<6x4xf32>
    %c1_82 = arith.constant 1 : index
    %c0_83 = arith.constant 0 : index
    %c0_84 = arith.constant 0 : index
    %184 = vector.load %arg4[%c1_82, %c0_83, %c0_84] : memref<2x6x6xf32, #tpu.memory_space<vmem>>, vector<1x6x6xf32>
    %185 = vector.shape_cast %184 : vector<1x6x6xf32> to vector<6x6xf32>
    %cst_85 = arith.constant dense<0.000000e+00> : vector<4x8xf32>
    %186 = tpu.matmul %183, %182, %cst_85 {dimension_numbers = #tpu.dot_dimension_numbers<[0], [0], [1], [1], [0, 1, 1, 1], [], []>} : vector<6x4xf32>, vector<6x8xf32>, vector<4x8xf32> -> vector<4x8xf32>
    %cst_86 = arith.constant dense<0.000000e+00> : vector<4x6xf32>
    %187 = tpu.matmul %183, %185, %cst_86 {dimension_numbers = #tpu.dot_dimension_numbers<[0], [0], [1], [1], [0, 1, 1, 1], [], []>} : vector<6x4xf32>, vector<6x6xf32>, vector<4x6xf32> -> vector<4x6xf32>
    %cst_87 = arith.constant dense<0.000000e+00> : vector<4x4xf32>
    %188 = tpu.matmul %187, %183, %cst_87 {dimension_numbers = #tpu.dot_dimension_numbers<[1], [0], [0], [1], [0, 0, 1, 1], [], []>} : vector<4x6xf32>, vector<6x4xf32>, vector<4x4xf32> -> vector<4x4xf32>
    %189 = tpu.iota {dimensions = array<i32: 0>} : vector<4x4xi32>
    %190 = tpu.iota {dimensions = array<i32: 1>} : vector<4x4xi32>
    %191 = arith.cmpi eq, %189, %190 : vector<4x4xi32>
    %cst_88 = arith.constant 0.000000e+00 : f32
    %192 = vector.broadcast %cst_88 : f32 to vector<4x4xf32>
    %193 = arith.select %191, %192, %188 : vector<4x4xi1>, vector<4x4xf32>
    %cst_89 = arith.constant dense<0.000000e+00> : vector<4xf32>
    %194 = vector.multi_reduction <add>, %193, %cst_89 [1] : vector<4x4xf32> to vector<4xf32>
    %195 = vector.shape_cast %194 : vector<4xf32> to vector<4x1xf32>
    %cst_90 = arith.constant 1.000000e-15 : f32
    %196 = vector.broadcast %cst_90 : f32 to vector<4x1xf32>
    %197 = arith.addf %195, %196 : vector<4x1xf32>
    %198 = math.rsqrt %197 : vector<4x1xf32>
    %199 = vector.broadcast %198 : vector<4x1xf32> to vector<4x4xf32>
    %200 = arith.mulf %193, %199 : vector<4x4xf32>
    %201 = tpu.transpose %198, [1, 0] : vector<4x1xf32> -> vector<1x4xf32>
    %202 = vector.broadcast %201 : vector<1x4xf32> to vector<4x4xf32>
    %203 = arith.mulf %200, %202 : vector<4x4xf32>
    %cst_91 = arith.constant dense<0.000000e+00> : vector<4x8xf32>
    %204 = tpu.matmul %203, %186, %cst_91 {dimension_numbers = #tpu.dot_dimension_numbers<[1], [0], [0], [1], [0, 0, 1, 1], [], []>} : vector<4x4xf32>, vector<4x8xf32>, vector<4x8xf32> -> vector<4x8xf32>
    %205 = tpu.concatenate %204, %186 in 1 : vector<4x8xf32>, vector<4x8xf32> -> vector<4x16xf32>
    %cst_92 = arith.constant dense<0.000000e+00> : vector<4x8xf32>
    %206 = tpu.matmul %205, %145, %cst_92 {dimension_numbers = #tpu.dot_dimension_numbers<[1], [0], [0], [1], [0, 0, 1, 1], [], []>} : vector<4x16xf32>, vector<16x8xf32>, vector<4x8xf32> -> vector<4x8xf32>
    %207 = vector.broadcast %146 : vector<1x8xf32> to vector<4x8xf32>
    %208 = arith.addf %206, %207 : vector<4x8xf32>
    %cst_93 = arith.constant 0.000000e+00 : f32
    %209 = vector.broadcast %cst_93 : f32 to vector<4x8xf32>
    %210 = arith.maximumf %208, %209 : vector<4x8xf32>
    %211 = tpu.concatenate %179, %210 in 0 : vector<4x8xf32>, vector<4x8xf32> -> vector<8x8xf32>
    %c0_94 = arith.constant 0 : index
    %c0_95 = arith.constant 0 : index
    %212 = vector.load %arg14[%c0_94, %c0_95] : memref<8x2xf32, #tpu.memory_space<vmem>>, vector<8x2xf32>
    %cst_96 = arith.constant dense<0.000000e+00> : vector<8x2xf32>
    %213 = tpu.matmul %211, %212, %cst_96 {dimension_numbers = #tpu.dot_dimension_numbers<[1], [0], [0], [1], [0, 0, 1, 1], [], []>} : vector<8x8xf32>, vector<8x2xf32>, vector<8x2xf32> -> vector<8x2xf32>
    %c0_97 = arith.constant 0 : index
    %c0_98 = arith.constant 0 : index
    %214 = vector.load %arg15[%c0_97, %c0_98] : memref<1x2xf32, #tpu.memory_space<vmem>>, vector<1x2xf32>
    %215 = vector.broadcast %214 : vector<1x2xf32> to vector<8x2xf32>
    %216 = arith.addf %213, %215 : vector<8x2xf32>
    %cst_99 = arith.constant dense<0xFF800000> : vector<8xf32>
    %217 = vector.multi_reduction <maximumf>, %216, %cst_99 [1] : vector<8x2xf32> to vector<8xf32>
    %218 = vector.shape_cast %217 : vector<8xf32> to vector<8x1xf32>
    %219 = vector.broadcast %218 : vector<8x1xf32> to vector<8x2xf32>
    %220 = arith.subf %216, %219 : vector<8x2xf32>
    %221 = math.exp %220 : vector<8x2xf32>
    %cst_100 = arith.constant dense<0.000000e+00> : vector<8xf32>
    %222 = vector.multi_reduction <add>, %221, %cst_100 [1] : vector<8x2xf32> to vector<8xf32>
    %223 = vector.shape_cast %222 : vector<8xf32> to vector<8x1xf32>
    %224 = vector.broadcast %223 : vector<8x1xf32> to vector<8x2xf32>
    %225 = arith.divf %221, %224 : vector<8x2xf32>
    %226 = vector.extract_strided_slice %225 {offsets = [0, 0], sizes = [4, 2], strides = [1, 1]} : vector<8x2xf32> to vector<4x2xf32>
    %cst_101 = arith.constant dense<0.000000e+00> : vector<2x8xf32>
    %227 = tpu.matmul %226, %179, %cst_101 {dimension_numbers = #tpu.dot_dimension_numbers<[0], [0], [1], [1], [0, 1, 1, 1], [], []>} : vector<4x2xf32>, vector<4x8xf32>, vector<2x8xf32> -> vector<2x8xf32>
    %cst_102 = arith.constant dense<0.000000e+00> : vector<2x4xf32>
    %228 = tpu.matmul %226, %172, %cst_102 {dimension_numbers = #tpu.dot_dimension_numbers<[0], [0], [1], [1], [0, 1, 1, 1], [], []>} : vector<4x2xf32>, vector<4x4xf32>, vector<2x4xf32> -> vector<2x4xf32>
    %cst_103 = arith.constant dense<0.000000e+00> : vector<2x2xf32>
    %229 = tpu.matmul %228, %226, %cst_103 {dimension_numbers = #tpu.dot_dimension_numbers<[1], [0], [0], [1], [0, 0, 1, 1], [], []>} : vector<2x4xf32>, vector<4x2xf32>, vector<2x2xf32> -> vector<2x2xf32>
    %230 = tpu.iota {dimensions = array<i32: 0>} : vector<2x2xi32>
    %231 = tpu.iota {dimensions = array<i32: 1>} : vector<2x2xi32>
    %232 = arith.cmpi eq, %230, %231 : vector<2x2xi32>
    %cst_104 = arith.constant 0.000000e+00 : f32
    %233 = vector.broadcast %cst_104 : f32 to vector<2x2xf32>
    %234 = arith.select %232, %233, %229 : vector<2x2xi1>, vector<2x2xf32>
    %cst_105 = arith.constant dense<0.000000e+00> : vector<2xf32>
    %235 = vector.multi_reduction <add>, %234, %cst_105 [1] : vector<2x2xf32> to vector<2xf32>
    %236 = vector.shape_cast %235 : vector<2xf32> to vector<2x1xf32>
    %cst_106 = arith.constant 1.000000e-15 : f32
    %237 = vector.broadcast %cst_106 : f32 to vector<2x1xf32>
    %238 = arith.addf %236, %237 : vector<2x1xf32>
    %239 = math.rsqrt %238 : vector<2x1xf32>
    %240 = vector.broadcast %239 : vector<2x1xf32> to vector<2x2xf32>
    %241 = arith.mulf %234, %240 : vector<2x2xf32>
    %242 = tpu.transpose %239, [1, 0] : vector<2x1xf32> -> vector<1x2xf32>
    %243 = vector.broadcast %242 : vector<1x2xf32> to vector<2x2xf32>
    %244 = arith.mulf %241, %243 : vector<2x2xf32>
    %cst_107 = arith.constant dense<0.000000e+00> : vector<2x8xf32>
    %245 = tpu.matmul %244, %227, %cst_107 {dimension_numbers = #tpu.dot_dimension_numbers<[1], [0], [0], [1], [0, 0, 1, 1], [], []>} : vector<2x2xf32>, vector<2x8xf32>, vector<2x8xf32> -> vector<2x8xf32>
    %246 = tpu.concatenate %245, %227 in 1 : vector<2x8xf32>, vector<2x8xf32> -> vector<2x16xf32>
    %cst_108 = arith.constant dense<0.000000e+00> : vector<2x8xf32>
    %247 = tpu.matmul %246, %147, %cst_108 {dimension_numbers = #tpu.dot_dimension_numbers<[1], [0], [0], [1], [0, 0, 1, 1], [], []>} : vector<2x16xf32>, vector<16x8xf32>, vector<2x8xf32> -> vector<2x8xf32>
    %248 = vector.broadcast %148 : vector<1x8xf32> to vector<2x8xf32>
    %249 = arith.addf %247, %248 : vector<2x8xf32>
    %cst_109 = arith.constant dense<0.000000e+00> : vector<8xf32>
    %250 = vector.multi_reduction <add>, %249, %cst_109 [0] : vector<2x8xf32> to vector<8xf32>
    %251 = vector.shape_cast %250 : vector<8xf32> to vector<1x8xf32>
    %cst_110 = arith.constant 2.000000e+00 : f32
    %252 = vector.broadcast %cst_110 : f32 to vector<1x8xf32>
    %253 = arith.divf %251, %252 : vector<1x8xf32>
    %254 = vector.extract_strided_slice %225 {offsets = [4, 0], sizes = [4, 2], strides = [1, 1]} : vector<8x2xf32> to vector<4x2xf32>
    %cst_111 = arith.constant dense<0.000000e+00> : vector<2x8xf32>
    %255 = tpu.matmul %254, %210, %cst_111 {dimension_numbers = #tpu.dot_dimension_numbers<[0], [0], [1], [1], [0, 1, 1, 1], [], []>} : vector<4x2xf32>, vector<4x8xf32>, vector<2x8xf32> -> vector<2x8xf32>
    %cst_112 = arith.constant dense<0.000000e+00> : vector<2x4xf32>
    %256 = tpu.matmul %254, %203, %cst_112 {dimension_numbers = #tpu.dot_dimension_numbers<[0], [0], [1], [1], [0, 1, 1, 1], [], []>} : vector<4x2xf32>, vector<4x4xf32>, vector<2x4xf32> -> vector<2x4xf32>
    %cst_113 = arith.constant dense<0.000000e+00> : vector<2x2xf32>
    %257 = tpu.matmul %256, %254, %cst_113 {dimension_numbers = #tpu.dot_dimension_numbers<[1], [0], [0], [1], [0, 0, 1, 1], [], []>} : vector<2x4xf32>, vector<4x2xf32>, vector<2x2xf32> -> vector<2x2xf32>
    %258 = tpu.iota {dimensions = array<i32: 0>} : vector<2x2xi32>
    %259 = tpu.iota {dimensions = array<i32: 1>} : vector<2x2xi32>
    %260 = arith.cmpi eq, %258, %259 : vector<2x2xi32>
    %cst_114 = arith.constant 0.000000e+00 : f32
    %261 = vector.broadcast %cst_114 : f32 to vector<2x2xf32>
    %262 = arith.select %260, %261, %257 : vector<2x2xi1>, vector<2x2xf32>
    %cst_115 = arith.constant dense<0.000000e+00> : vector<2xf32>
    %263 = vector.multi_reduction <add>, %262, %cst_115 [1] : vector<2x2xf32> to vector<2xf32>
    %264 = vector.shape_cast %263 : vector<2xf32> to vector<2x1xf32>
    %cst_116 = arith.constant 1.000000e-15 : f32
    %265 = vector.broadcast %cst_116 : f32 to vector<2x1xf32>
    %266 = arith.addf %264, %265 : vector<2x1xf32>
    %267 = math.rsqrt %266 : vector<2x1xf32>
    %268 = vector.broadcast %267 : vector<2x1xf32> to vector<2x2xf32>
    %269 = arith.mulf %262, %268 : vector<2x2xf32>
    %270 = tpu.transpose %267, [1, 0] : vector<2x1xf32> -> vector<1x2xf32>
    %271 = vector.broadcast %270 : vector<1x2xf32> to vector<2x2xf32>
    %272 = arith.mulf %269, %271 : vector<2x2xf32>
    %cst_117 = arith.constant dense<0.000000e+00> : vector<2x8xf32>
    %273 = tpu.matmul %272, %255, %cst_117 {dimension_numbers = #tpu.dot_dimension_numbers<[1], [0], [0], [1], [0, 0, 1, 1], [], []>} : vector<2x2xf32>, vector<2x8xf32>, vector<2x8xf32> -> vector<2x8xf32>
    %274 = tpu.concatenate %273, %255 in 1 : vector<2x8xf32>, vector<2x8xf32> -> vector<2x16xf32>
    %cst_118 = arith.constant dense<0.000000e+00> : vector<2x8xf32>
    %275 = tpu.matmul %274, %147, %cst_118 {dimension_numbers = #tpu.dot_dimension_numbers<[1], [0], [0], [1], [0, 0, 1, 1], [], []>} : vector<2x16xf32>, vector<16x8xf32>, vector<2x8xf32> -> vector<2x8xf32>
    %276 = vector.broadcast %148 : vector<1x8xf32> to vector<2x8xf32>
    %277 = arith.addf %275, %276 : vector<2x8xf32>
    %cst_119 = arith.constant dense<0.000000e+00> : vector<8xf32>
    %278 = vector.multi_reduction <add>, %277, %cst_119 [0] : vector<2x8xf32> to vector<8xf32>
    %279 = vector.shape_cast %278 : vector<8xf32> to vector<1x8xf32>
    %cst_120 = arith.constant 2.000000e+00 : f32
    %280 = vector.broadcast %cst_120 : f32 to vector<1x8xf32>
    %281 = arith.divf %279, %280 : vector<1x8xf32>
    %282 = tpu.concatenate %253, %281 in 0 : vector<1x8xf32>, vector<1x8xf32> -> vector<2x8xf32>
    %c0_121 = arith.constant 0 : index
    %c0_122 = arith.constant 0 : index
    %283 = vector.load %arg18[%c0_121, %c0_122] : memref<8x8xf32, #tpu.memory_space<vmem>>, vector<8x8xf32>
    %cst_123 = arith.constant dense<0.000000e+00> : vector<2x8xf32>
    %284 = tpu.matmul %282, %283, %cst_123 {dimension_numbers = #tpu.dot_dimension_numbers<[1], [0], [0], [1], [0, 0, 1, 1], [], []>} : vector<2x8xf32>, vector<8x8xf32>, vector<2x8xf32> -> vector<2x8xf32>
    %c0_124 = arith.constant 0 : index
    %c0_125 = arith.constant 0 : index
    %285 = vector.load %arg19[%c0_124, %c0_125] : memref<1x8xf32, #tpu.memory_space<vmem>>, vector<1x8xf32>
    %286 = vector.broadcast %285 : vector<1x8xf32> to vector<2x8xf32>
    %287 = arith.addf %284, %286 : vector<2x8xf32>
    %cst_126 = arith.constant 0.000000e+00 : f32
    %288 = vector.broadcast %cst_126 : f32 to vector<2x8xf32>
    %289 = arith.maximumf %287, %288 : vector<2x8xf32>
    %c0_127 = arith.constant 0 : index
    %c0_128 = arith.constant 0 : index
    %290 = vector.load %arg20[%c0_127, %c0_128] : memref<8x1xf32, #tpu.memory_space<vmem>>, vector<8x1xf32>
    %cst_129 = arith.constant dense<0.000000e+00> : vector<2x1xf32>
    %291 = tpu.matmul %289, %290, %cst_129 {dimension_numbers = #tpu.dot_dimension_numbers<[1], [0], [0], [1], [0, 0, 1, 1], [], []>} : vector<2x8xf32>, vector<8x1xf32>, vector<2x1xf32> -> vector<2x1xf32>
    %c0_130 = arith.constant 0 : index
    %c0_131 = arith.constant 0 : index
    %292 = vector.load %arg21[%c0_130, %c0_131] : memref<1x1xf32, #tpu.memory_space<vmem>>, vector<1x1xf32>
    %293 = vector.broadcast %292 : vector<1x1xf32> to vector<2x1xf32>
    %294 = arith.addf %291, %293 : vector<2x1xf32>
    %295 = arith.negf %294 : vector<2x1xf32>
    %296 = math.exp %295 : vector<2x1xf32>
    %cst_132 = arith.constant 1.000000e+00 : f32
    %297 = vector.broadcast %cst_132 : f32 to vector<2x1xf32>
    %298 = arith.addf %297, %296 : vector<2x1xf32>
    %299 = arith.divf %297, %298 : vector<2x1xf32>
    %c0_133 = arith.constant 0 : index
    %c0_134 = arith.constant 0 : index
    %300 = vector.load %arg22[%c0_133, %c0_134] : memref<2x1xf32, #tpu.memory_space<vmem>>, vector<2x1xf32>
    tpu.vector_store %arg22[%c0_133, %c0_134], %299 {strides = array<i32>} : memref<2x1xf32, #tpu.memory_space<vmem>>, vector<2x1xf32>,
    return
  }
}

</mosaic_0001>

<llo_original>
// kernel: model_forward.1
$region0: #{model_forward.1}
  #allocation0 [shape = 'u32[]', space=smem, size = 0x4, offset = 0x4, fixed_abs, tag = 'smem constant byte address 0x4 - core index']
  #allocation1 [shape = 'u32[72,128]{1,0:T(1,128)}', space=vmem, size = 0x9000, scoped, tag = 'internal scratch']
  #allocation2 [shape = 'f32[1,1]{1,0:T(1,128)S(1)}', space=vmem, size = 0x200, scoped, tag = 'scoped memory for model_forward.1']
  %s0 = inlined_call_operand.vmem [shape: f32[11,4], index: 0, kind: input, shape index: {}]
  %s1 = inlined_call_operand.vmem [shape: f32[11,11], index: 1, kind: input, shape index: {}]
  %s2 = inlined_call_operand.vmem [shape: bf16[5,11,11], index: 2, kind: input, shape index: {}]
  %s3 = inlined_call_operand.vmem [shape: f32[2,6,11], index: 3, kind: input, shape index: {}]
  %s4 = inlined_call_operand.vmem [shape: f32[2,6,6], index: 4, kind: input, shape index: {}]
  %s5 = inlined_call_operand.vmem [shape: f32[1,4], index: 5, kind: input, shape index: {}]
  %s6 = inlined_call_operand.vmem [shape: f32[1,4], index: 6, kind: input, shape index: {}]
  %s7 = inlined_call_operand.vmem [shape: f32[4,32], index: 7, kind: input, shape index: {}]
  %s8 = inlined_call_operand.vmem [shape: f32[1,32], index: 8, kind: input, shape index: {}]
  %s9 = inlined_call_operand.vmem [shape: f32[5,8], index: 9, kind: input, shape index: {}]
  %s10 = inlined_call_operand.vmem [shape: f32[8,4], index: 10, kind: input, shape index: {}]
  %s11 = inlined_call_operand.vmem [shape: f32[1,4], index: 11, kind: input, shape index: {}]
  %s12 = inlined_call_operand.vmem [shape: f32[16,8], index: 12, kind: input, shape index: {}]
  %s13 = inlined_call_operand.vmem [shape: f32[1,8], index: 13, kind: input, shape index: {}]
  %s14 = inlined_call_operand.vmem [shape: f32[8,2], index: 14, kind: input, shape index: {}]
  %s15 = inlined_call_operand.vmem [shape: f32[1,2], index: 15, kind: input, shape index: {}]
  %s16 = inlined_call_operand.vmem [shape: f32[16,8], index: 16, kind: input, shape index: {}]
  %s17 = inlined_call_operand.vmem [shape: f32[1,8], index: 17, kind: input, shape index: {}]
  %s18 = inlined_call_operand.vmem [shape: f32[8,8], index: 18, kind: input, shape index: {}]
  %s19 = inlined_call_operand.vmem [shape: f32[1,8], index: 19, kind: input, shape index: {}]
  %s20 = inlined_call_operand.vmem [shape: f32[8,1], index: 20, kind: input, shape index: {}]
  %s21 = inlined_call_operand.<no memory space> [shape: f32[1,1], index: 21, kind: input, shape index: {}]
  %s22 = inlined_call_operand.vmem [shape: f32[2,1], index: 22, kind: output, shape index: {}]
  %s23 = sld [smem:[#allocation0]]
  $region98: #{model_forward.1} parent=0
    _
  %s25 = ssub.s32 1, %s23
  %s26 = scalar_select 0, %s25, %s23
  %v27 = vstv %s21
  %28 = vst [vmem:[#allocation2] sm:$0x1] %v27
  // Predicated region
  $region2: #{model_forward.1} parent=0 // pred_check
    _
  $region3: #{model_forward.1} parent=0 // pred_check_branch
    %30 = sbr.rel (0) target = $region5
  $region4: #{model_forward.1} parent=0 // pred_region
    _
  $region5: #{model_forward.1} parent=0 // pred_fallthru
    _
  // Predicated region
  $region6: #{model_forward.1} parent=0 // pred_check
    _
  $region7: #{model_forward.1} parent=0 // pred_check_branch
    %32 = sbr.rel (0) target = $region9
  $region8: #{model_forward.1} parent=0 // pred_region
    _
  $region9: #{model_forward.1} parent=0 // pred_fallthru
    _
  // Predicated region
  $region10: #{model_forward.1} parent=0 // pred_check
    _
  $region11: #{model_forward.1} parent=0 // pred_check_branch
    %34 = sbr.rel (0) target = $region13
  $region12: #{model_forward.1} parent=0 // pred_region
    _
  $region13: #{model_forward.1} parent=0 // pred_fallthru
    _
  // Predicated region
  $region14: #{model_forward.1} parent=0 // pred_check
    _
  $region15: #{model_forward.1} parent=0 // pred_check_branch
    %36 = sbr.rel (0) target = $region17
  $region16: #{model_forward.1} parent=0 // pred_region
    _
  $region17: #{model_forward.1} parent=0 // pred_fallthru
    _
  // Predicated region
  $region18: #{model_forward.1} parent=0 // pred_check
    _
  $region19: #{model_forward.1} parent=0 // pred_check_branch
    %38 = sbr.rel (0) target = $region21
  $region20: #{model_forward.1} parent=0 // pred_region
    _
  $region21: #{model_forward.1} parent=0 // pred_fallthru
    _
  // Predicated region
  $region22: #{model_forward.1} parent=0 // pred_check
    _
  $region23: #{model_forward.1} parent=0 // pred_check_branch
    %40 = sbr.rel (0) target = $region25
  $region24: #{model_forward.1} parent=0 // pred_region
    _
  $region25: #{model_forward.1} parent=0 // pred_fallthru
    _
  // Predicated region
  $region26: #{model_forward.1} parent=0 // pred_check
    _
  $region27: #{model_forward.1} parent=0 // pred_check_branch
    %42 = sbr.rel (0) target = $region29
  $region28: #{model_forward.1} parent=0 // pred_region
    _
  $region29: #{model_forward.1} parent=0 // pred_fallthru
    _
  // Predicated region
  $region30: #{model_forward.1} parent=0 // pred_check
    _
  $region31: #{model_forward.1} parent=0 // pred_check_branch
    %44 = sbr.rel (0) target = $region33
  $region32: #{model_forward.1} parent=0 // pred_region
    _
  $region33: #{model_forward.1} parent=0 // pred_fallthru
    _
  // Predicated region
  $region34: #{model_forward.1} parent=0 // pred_check
    _
  $region35: #{model_forward.1} parent=0 // pred_check_branch
    %46 = sbr.rel (0) target = $region37
  $region36: #{model_forward.1} parent=0 // pred_region
    _
  $region37: #{model_forward.1} parent=0 // pred_fallthru
    _
  // Predicated region
  $region38: #{model_forward.1} parent=0 // pred_check
    _
  $region39: #{model_forward.1} parent=0 // pred_check_branch
    %48 = sbr.rel (0) target = $region41
  $region40: #{model_forward.1} parent=0 // pred_region
    _
  $region41: #{model_forward.1} parent=0 // pred_fallthru
    _
  // Predicated region
  $region42: #{model_forward.1} parent=0 // pred_check
    _
  $region43: #{model_forward.1} parent=0 // pred_check_branch
    %50 = sbr.rel (0) target = $region45
  $region44: #{model_forward.1} parent=0 // pred_region
    _
  $region45: #{model_forward.1} parent=0 // pred_fallthru
    _
  // Predicated region
  $region46: #{model_forward.1} parent=0 // pred_check
    _
  $region47: #{model_forward.1} parent=0 // pred_check_branch
    %52 = sbr.rel (0) target = $region49
  $region48: #{model_forward.1} parent=0 // pred_region
    _
  $region49: #{model_forward.1} parent=0 // pred_fallthru
    _
  // Predicated region
  $region50: #{model_forward.1} parent=0 // pred_check
    _
  $region51: #{model_forward.1} parent=0 // pred_check_branch
    %54 = sbr.rel (0) target = $region53
  $region52: #{model_forward.1} parent=0 // pred_region
    _
  $region53: #{model_forward.1} parent=0 // pred_fallthru
    _
  // Predicated region
  $region54: #{model_forward.1} parent=0 // pred_check
    _
  $region55: #{model_forward.1} parent=0 // pred_check_branch
    %56 = sbr.rel (0) target = $region57
  $region56: #{model_forward.1} parent=0 // pred_region
    _
  $region57: #{model_forward.1} parent=0 // pred_fallthru
    _
  // Predicated region
  $region58: #{model_forward.1} parent=0 // pred_check
    _
  $region59: #{model_forward.1} parent=0 // pred_check_branch
    %58 = sbr.rel (0) target = $region61
  $region60: #{model_forward.1} parent=0 // pred_region
    _
  $region61: #{model_forward.1} parent=0 // pred_fallthru
    _
  // Predicated region
  $region62: #{model_forward.1} parent=0 // pred_check
    _
  $region63: #{model_forward.1} parent=0 // pred_check_branch
    %60 = sbr.rel (0) target = $region65
  $region64: #{model_forward.1} parent=0 // pred_region
    _
  $region65: #{model_forward.1} parent=0 // pred_fallthru
    _
  // Predicated region
  $region66: #{model_forward.1} parent=0 // pred_check
    _
  $region67: #{model_forward.1} parent=0 // pred_check_branch
    %62 = sbr.rel (0) target = $region69
  $region68: #{model_forward.1} parent=0 // pred_region
    _
  $region69: #{model_forward.1} parent=0 // pred_fallthru
    _
  // Predicated region
  $region70: #{model_forward.1} parent=0 // pred_check
    _
  $region71: #{model_forward.1} parent=0 // pred_check_branch
    %64 = sbr.rel (0) target = $region73
  $region72: #{model_forward.1} parent=0 // pred_region
    _
  $region73: #{model_forward.1} parent=0 // pred_fallthru
    _
  // Predicated region
  $region74: #{model_forward.1} parent=0 // pred_check
    _
  $region75: #{model_forward.1} parent=0 // pred_check_branch
    %66 = sbr.rel (0) target = $region77
  $region76: #{model_forward.1} parent=0 // pred_region
    _
  $region77: #{model_forward.1} parent=0 // pred_fallthru
    _
  // Predicated region
  $region78: #{model_forward.1} parent=0 // pred_check
    _
  $region79: #{model_forward.1} parent=0 // pred_check_branch
    %68 = sbr.rel (0) target = $region81
  $region80: #{model_forward.1} parent=0 // pred_region
    _
  $region81: #{model_forward.1} parent=0 // pred_fallthru
    _
  // Predicated region
  $region82: #{model_forward.1} parent=0 // pred_check
    _
  $region83: #{model_forward.1} parent=0 // pred_check_branch
    %70 = sbr.rel (0) target = $region85
  $region84: #{model_forward.1} parent=0 // pred_region
    _
  $region85: #{model_forward.1} parent=0 // pred_fallthru
    _
  // Predicated region
  $region86: #{model_forward.1} parent=0 // pred_check
    _
  $region87: #{model_forward.1} parent=0 // pred_check_branch
    %72 = sbr.rel (0) target = $region89
  $region88: #{model_forward.1} parent=0 // pred_region
    _
  $region89: #{model_forward.1} parent=0 // pred_fallthru
    _
  %v73 = vld [vmem:[%s0] sm:$0xff]
  %v74 = vld [vmem:[%s0 + $0x8] sm:$0x7]
  %vm75 = vcmask 31744
  %v76 = vsel %vm75, %v73, 0.0
  %vm77 = vcmask 26624
  %v78 = vsel %vm77, %v74, 0.0
  %v79 = vadd.f32 %v76, %v78
  %v80 = vrot.slane %v79, 4
  %v81 = vadd.f32 %v79, %v80
  %v82 = vrot.slane %v81, 2
  %v83 = vadd.f32 %v81, %v82
  %v84 = vrot.slane %v83, 1
  %v85 = vadd.f32 %v83, %v84
  %v86 = vrcp.pop 11.0
  %v87 = vmul.f32 11.0, %v86
  %v88 = vsub.f32 1.0, %v87
  %v89 = vmul.f32 %v86, %v88
  %v90 = vadd.f32 %v86, %v89
  %vm91 = vweird.f32 %v86
  %v92 = vsel %vm91, %v86, %v90
  %v93 = vmul.f32 %v85, %v92
  %v94 = vsub.f32 %v73, %v93
  %v95 = vsub.f32 %v74, %v93
  %v96 = vmul.f32 %v94, %v94
  %v97 = vmul.f32 %v95, %v95
  %v98 = vsel %vm75, %v96, 0.0
  %v99 = vsel %vm77, %v97, 0.0
  %v100 = vadd.f32 %v98, %v99
  %v101 = vrot.slane %v100, 4
  %v102 = vadd.f32 %v100, %v101
  %v103 = vrot.slane %v102, 2
  %v104 = vadd.f32 %v102, %v103
  %v105 = vrot.slane %v104, 1
  %v106 = vadd.f32 %v104, %v105
  %v107 = vmul.f32 %v106, %v92
  %v108 = vadd.f32 %v107, 1e-05
  %v109 = vrsqrt.pop %v108
  %v110 = vmul.f32 %v109, %v108
  %v111 = vmul.f32 %v110, %v109
  %v112 = vmul.f32 0.5, %v111
  %v113 = vsub.f32 1.5, %v112
  %v114 = vmul.f32 %v109, %v113
  %vm115 = vweird.f32 %v108
  %vm116 = vweird.f32 %v109
  %vm117 = vmor %vm115, %vm116
  %v118 = vsel %vm117, %v109, %v114
  %v119 = vmul.f32 %v94, %v118
  %v120 = vmul.f32 %v95, %v118
  %v121 = vld [vmem:[%s5] sm:$0x1]
  %v123 = vperm.slane %v121, 0
  %v125 = vmul.f32 %v119, %v123
  %v126 = vmul.f32 %v120, %v123
  %v127 = vld [vmem:[%s6] sm:$0x1]
  %v129 = vperm.slane %v127, 0
  %v131 = vadd.f32 %v125, %v129
  %v132 = vadd.f32 %v126, %v129
  %v133 = vld [vmem:[%s1] sm:$0xff]
  %v134 = vld [vmem:[%s1 + $0x8] sm:$0x7]
  %v135 = vld [vmem:[%s9] sm:$0x1f]
  %v136 = vld [vmem:[%s7] sm:$0xf]
  %v137 = vld [vmem:[%s8] sm:$0x1]
  %v139 = vperm.slane %v137, 0
  %v142 = vsel %vm75, %v131, 0
  %v145 = vsel %vm75, %v132, 0
  %vm147 = vcmask 1043456
  %v149 = vsel %vm147, %v136, 0
  %151 = vmatpush.msra.mxu0 0.0
  %152 = vmatpush.msra.mxu0 0.0
  %153 = vmatpush.msra.mxu0 0.0
  %154 = vmatpush.msra.mxu0 0.0
  %155 = vmatpush.msra.mxu0 0.0
  %156 = vmatpush.msra.mxu0 0.0
  %157 = vmatpush.msra.mxu0 0.0
  %158 = vmatpush.msra.mxu0 0.0
  %159 = vmatpush.msra.mxu0 0.0
  %160 = vmatpush.msra.mxu0 0.0
  %161 = vmatpush.msra.mxu0 0.0
  %162 = vmatpush.msra.mxu0 0.0
  %163 = vmatpush.msra.mxu0 0.0
  %164 = vmatpush.msra.mxu0 0.0
  %165 = vmatpush.msra.mxu0 0.0
  %166 = vmatpush.msra.mxu0 %v149
  %167 = vmatmul.f32.gmra.mxu0 %v142
  %v168 = vpop.f32.mrf.mxu0
  %v169 = vadd.f32 %v139, %v168
  %170 = vmatmul.f32.gmra.mxu0 %v145
  %v171 = vpop.f32.mrf.mxu0
  %v172 = vadd.f32 %v139, %v171
  %173 = vdwg.mxu0
  %vm174 = vcmask 64512
  %v176 = vsel %vm174, %v169, 0
  %v179 = vsel %vm174, %v172, 0
  %v182 = vsel %vm174, %v135, 0
  %184 = vmatpush.xpose.msra.mxu0 0.0
  %185 = vmatpush.xpose.msra.mxu0 0.0
  %186 = vmatpush.xpose.msra.mxu0 0.0
  %187 = vmatpush.xpose.msra.mxu0 0.0
  %188 = vmatpush.xpose.msra.mxu0 0.0
  %189 = vmatpush.xpose.msra.mxu0 0.0
  %190 = vmatpush.xpose.msra.mxu0 0.0
  %191 = vmatpush.xpose.msra.mxu0 0.0
  %192 = vmatpush.xpose.msra.mxu0 0.0
  %193 = vmatpush.xpose.msra.mxu0 0.0
  %194 = vmatpush.xpose.msra.mxu0 0.0
  %195 = vmatpush.xpose.msra.mxu0 0.0
  %196 = vmatpush.xpose.msra.mxu0 0.0
  %197 = vmatpush.xpose.msra.mxu0 0.0
  %198 = vmatpush.xpose.msra.mxu0 0.0
  %199 = vmatpush.xpose.msra.mxu0 %v182
  %200 = vmatmul.f32.gmra.mxu0 %v176
  %v201 = vpop.f32.mrf.mxu0
  %v202 = vadd.f32 0.0, %v201
  %203 = vmatmul.f32.gmra.mxu0 %v179
  %v204 = vpop.f32.mrf.mxu0
  %v205 = vadd.f32 0.0, %v204
  %206 = vdwg.mxu0
  %v207 = vld [vmem:[%s2] sm:$0xf]
  %v208 = vld [vmem:[%s2 + $0x4] sm:$0x3]
  %v209 = vunpack.c.l.bf16 %v207
  %v210 = vunpack.c.l.bf16 %v208
  %s211 = scalar_lea.vmem %s2, 8
  %v212 = vld [vmem:[%s211] sm:$0xf]
  %v213 = vld [vmem:[%s211 + $0x4] sm:$0x3]
  %v214 = vunpack.c.l.bf16 %v212
  %v215 = vunpack.c.l.bf16 %v213
  %s216 = scalar_lea.vmem %s2, 16
  %v217 = vld [vmem:[%s216] sm:$0xf]
  %v218 = vld [vmem:[%s216 + $0x4] sm:$0x3]
  %v219 = vunpack.c.l.bf16 %v217
  %v220 = vunpack.c.l.bf16 %v218
  %s221 = scalar_lea.vmem %s2, 24
  %v222 = vld [vmem:[%s221] sm:$0xf]
  %v223 = vld [vmem:[%s221 + $0x4] sm:$0x3]
  %v224 = vunpack.c.l.bf16 %v222
  %v225 = vunpack.c.l.bf16 %v223
  %s226 = scalar_lea.vmem %s2, 32
  %v227 = vld [vmem:[%s226] sm:$0xf]
  %v228 = vld [vmem:[%s226 + $0x4] sm:$0x3]
  %v229 = vunpack.c.l.bf16 %v227
  %v230 = vunpack.c.l.bf16 %v228
  %232 = vset.pattern.permute.xlu0 0
  %233 = vperm.xlu0 %232, %v202
  %v234 = vpop.permute.xlu0 %233
  %237 = vset.pattern.permute.xlu0 0
  %238 = vperm.xlu0 %237, %v205
  %v239 = vpop.permute.xlu0 %238
  %v241 = vmul.f32 %v234, %v209
  %v242 = vmul.f32 %v239, %v210
  %243 = vrot.lane.b32.xlu0 %v169, 120
  %v244 = vpop.permute.xlu0 %243
  %245 = vrot.lane.b32.xlu0 %v172, 120
  %v246 = vpop.permute.xlu0 %245
  %v247 = vsel %vm174, %v244, 0
  %v249 = vsel %vm174, %v246, 0
  %251 = vmatpush.xpose.msra.mxu0 0.0
  %252 = vmatpush.xpose.msra.mxu0 0.0
  %253 = vmatpush.xpose.msra.mxu0 0.0
  %254 = vmatpush.xpose.msra.mxu0 0.0
  %255 = vmatpush.xpose.msra.mxu0 0.0
  %256 = vmatpush.xpose.msra.mxu0 0.0
  %257 = vmatpush.xpose.msra.mxu0 0.0
  %258 = vmatpush.xpose.msra.mxu0 0.0
  %259 = vmatpush.xpose.msra.mxu0 0.0
  %260 = vmatpush.xpose.msra.mxu0 0.0
  %261 = vmatpush.xpose.msra.mxu0 0.0
  %262 = vmatpush.xpose.msra.mxu0 0.0
  %263 = vmatpush.xpose.msra.mxu0 0.0
  %264 = vmatpush.xpose.msra.mxu0 0.0
  %265 = vmatpush.xpose.msra.mxu0 %v249
  %266 = vmatpush.xpose.msra.mxu0 %v247
  %267 = vmatmul.f32.gmra.mxu0 %v176
  %v268 = vpop.f32.mrf.mxu0
  %v269 = vadd.f32 %v241, %v268
  %270 = vmatmul.f32.gmra.mxu0 %v179
  %v271 = vpop.f32.mrf.mxu0
  %v272 = vadd.f32 %v242, %v271
  %273 = vdwg.mxu0
  %274 = vset.pattern.permute.xlu0 1
  %275 = vperm.xlu0 %274, %v202
  %v276 = vpop.permute.xlu0 %275
  %278 = vset.pattern.permute.xlu0 1
  %279 = vperm.xlu0 %278, %v205
  %v280 = vpop.permute.xlu0 %279
  %v282 = vmul.f32 %v276, %v214
  %v283 = vmul.f32 %v280, %v215
  %v284 = vadd.f32 %v269, %v282
  %v285 = vadd.f32 %v272, %v283
  %286 = vset.pattern.permute.xlu0 2
  %287 = vperm.xlu0 %286, %v202
  %v288 = vpop.permute.xlu0 %287
  %290 = vset.pattern.permute.xlu0 2
  %291 = vperm.xlu0 %290, %v205
  %v292 = vpop.permute.xlu0 %291
  %v294 = vmul.f32 %v288, %v219
  %v295 = vmul.f32 %v292, %v220
  %v296 = vadd.f32 %v284, %v294
  %v297 = vadd.f32 %v285, %v295
  %298 = vset.pattern.permute.xlu0 3
  %299 = vperm.xlu0 %298, %v202
  %v300 = vpop.permute.xlu0 %299
  %302 = vset.pattern.permute.xlu0 3
  %303 = vperm.xlu0 %302, %v205
  %v304 = vpop.permute.xlu0 %303
  %v306 = vmul.f32 %v300, %v224
  %v307 = vmul.f32 %v304, %v225
  %v308 = vadd.f32 %v296, %v306
  %v309 = vadd.f32 %v297, %v307
  %310 = vset.pattern.permute.xlu0 4
  %311 = vperm.xlu0 %310, %v202
  %v312 = vpop.permute.xlu0 %311
  %314 = vset.pattern.permute.xlu0 4
  %315 = vperm.xlu0 %314, %v205
  %v316 = vpop.permute.xlu0 %315
  %v318 = vmul.f32 %v312, %v229
  %v319 = vmul.f32 %v316, %v230
  %v320 = vadd.f32 %v308, %v318
  %v321 = vadd.f32 %v309, %v319
  %v322 = vmul.f32 %v320, 0.35355338
  %v323 = vmul.f32 %v321, 0.35355338
  %vm324 = vcmp.gt.f32.partialorder %v133, 0.0
  %vm325 = vcmp.gt.f32.partialorder %v134, 0.0
  %v326 = vsel %vm324, %v322, -1e+30
  %v327 = vsel %vm325, %v323, -1e+30
  %vm328 = vcmask 89088
  %v329 = vsel %vm328, %v326, -inf
  %330 = vmax.xlane.f32.xlu0 %v329
  %v331 = vpop.xlane.xlu0 %330
  %vm332 = vcmask 83968
  %v333 = vsel %vm332, %v327, -inf
  %334 = vmax.xlane.f32.xlu0 %v333
  %v335 = vpop.xlane.xlu0 %334
  %v336 = vsub.f32 %v326, %v331
  %v337 = vsub.f32 %v327, %v335
  %v338 = vmul.f32 %v336, 1.442695
  %v339 = vpow.pop %v338
  %v340 = vmul.f32 %v337, 1.442695
  %v341 = vpow.pop %v340
  %v342 = vmul.f32 %v339, %v133
  %v343 = vmul.f32 %v341, %v134
  %v344 = vsel %vm328, %v342, 0.0
  %345 = vadd.xlane.f32.xlu0 %v344
  %v346 = vpop.xlane.xlu0 %345
  %v347 = vsel %vm332, %v343, 0.0
  %348 = vadd.xlane.f32.xlu0 %v347
  %v349 = vpop.xlane.xlu0 %348
  %v350 = vmax.f32 %v346, 1e-30
  %v351 = vmax.f32 %v349, 1e-30
  %v352 = vrcp.pop %v350
  %v353 = vmul.f32 %v350, %v352
  %v354 = vsub.f32 1.0, %v353
  %v355 = vmul.f32 %v352, %v354
  %v356 = vadd.f32 %v352, %v355
  %vm357 = vweird.f32 %v350
  %vm358 = vweird.f32 %v352
  %vm359 = vmor %vm357, %vm358
  %v360 = vsel %vm359, %v352, %v356
  %v361 = vand.u32 2147483647, %v350
  %vm362 = vcmp.eq.f32.partialorder %v361, 8.507059e+37
  %v363 = vand.u32 %v350, 2147483648
  %v364 = vor.u32 1.1754944e-38, %v363
  %v365 = vsel %vm362, %v364, %v360
  %v366 = vmul.f32 %v342, %v365
  %v367 = vrcp.pop %v351
  %v368 = vmul.f32 %v351, %v367
  %v369 = vsub.f32 1.0, %v368
  %v370 = vmul.f32 %v367, %v369
  %v371 = vadd.f32 %v367, %v370
  %vm372 = vweird.f32 %v351
  %vm373 = vweird.f32 %v367
  %vm374 = vmor %vm372, %vm373
  %v375 = vsel %vm374, %v367, %v371
  %v376 = vand.u32 2147483647, %v351
  %vm377 = vcmp.eq.f32.partialorder %v376, 8.507059e+37
  %v378 = vand.u32 %v351, 2147483648
  %v379 = vor.u32 1.1754944e-38, %v378
  %v380 = vsel %vm377, %v379, %v375
  %v381 = vmul.f32 %v343, %v380
  %v382 = vmul.f32 %v366, %v209
  %v383 = vmul.f32 %v381, %v210
  %v385 = vsel %vm328, %v382, 0
  %v388 = vsel %vm328, %v383, 0
  %vm390 = vcmask 1042432
  %v392 = vsel %vm390, 1.0, 0
  %394 = vmatpush.msra.mxu0 0.0
  %395 = vmatpush.msra.mxu0 0.0
  %396 = vmatpush.msra.mxu0 0.0
  %397 = vmatpush.msra.mxu0 0.0
  %398 = vmatpush.msra.mxu0 0.0
  %399 = vmatpush.msra.mxu0 0.0
  %400 = vmatpush.msra.mxu0 0.0
  %401 = vmatpush.msra.mxu0 0.0
  %402 = vmatpush.msra.mxu0 0.0
  %403 = vmatpush.msra.mxu0 0.0
  %404 = vmatpush.msra.mxu0 0.0
  %405 = vmatpush.msra.mxu0 0.0
  %406 = vmatpush.msra.mxu0 0.0
  %407 = vmatpush.msra.mxu0 0.0
  %408 = vmatpush.msra.mxu0 %v392
  %409 = vmatpush.msra.mxu0 1.0
  %410 = vmatmul.f32.gmra.mxu0 %v385
  %v411 = vpop.f32.mrf.mxu0
  %v412 = vadd.f32 0.0, %v411
  %413 = vmatmul.f32.gmra.mxu0 %v388
  %v414 = vpop.f32.mrf.mxu0
  %v415 = vadd.f32 0.0, %v414
  %416 = vdwg.mxu0
  %418 = vset.pattern.permute.xlu0 0
  %419 = vperm.xlu0 %418, %v412
  %v420 = vpop.permute.xlu0 %419
  %423 = vset.pattern.permute.xlu0 0
  %424 = vperm.xlu0 %423, %v415
  %v425 = vpop.permute.xlu0 %424
  %v427 = vperm.slane %v135, 0
  %v428 = vmul.f32 %v420, %v427
  %v429 = vmul.f32 %v425, %v427
  %430 = vrot.lane.b32.xlu0 %v169, 112
  %v431 = vpop.permute.xlu0 %430
  %432 = vrot.lane.b32.xlu0 %v172, 112
  %v433 = vpop.permute.xlu0 %432
  %v436 = vsel %vm328, %v366, 0
  %v439 = vsel %vm328, %v381, 0
  %v441 = vsel %vm390, %v433, 0
  %443 = vmatpush.msra.mxu0 0.0
  %444 = vmatpush.msra.mxu0 0.0
  %445 = vmatpush.msra.mxu0 0.0
  %446 = vmatpush.msra.mxu0 0.0
  %447 = vmatpush.msra.mxu0 0.0
  %448 = vmatpush.msra.mxu0 0.0
  %449 = vmatpush.msra.mxu0 0.0
  %450 = vmatpush.msra.mxu0 0.0
  %451 = vmatpush.msra.mxu0 0.0
  %452 = vmatpush.msra.mxu0 0.0
  %453 = vmatpush.msra.mxu0 0.0
  %454 = vmatpush.msra.mxu0 0.0
  %455 = vmatpush.msra.mxu0 0.0
  %456 = vmatpush.msra.mxu0 0.0
  %457 = vmatpush.msra.mxu0 %v441
  %458 = vmatpush.msra.mxu0 %v431
  %459 = vmatmul.f32.gmra.mxu0 %v436
  %v460 = vpop.f32.mrf.mxu0
  %v461 = vadd.f32 %v428, %v460
  %462 = vmatmul.f32.gmra.mxu0 %v439
  %v463 = vpop.f32.mrf.mxu0
  %v464 = vadd.f32 %v429, %v463
  %465 = vdwg.mxu0
  %v466 = vmul.f32 %v366, %v214
  %v467 = vmul.f32 %v381, %v215
  %v469 = vsel %vm328, %v466, 0
  %v472 = vsel %vm328, %v467, 0
  %474 = vmatpush.msra.mxu0 0.0
  %475 = vmatpush.msra.mxu0 0.0
  %476 = vmatpush.msra.mxu0 0.0
  %477 = vmatpush.msra.mxu0 0.0
  %478 = vmatpush.msra.mxu0 0.0
  %479 = vmatpush.msra.mxu0 0.0
  %480 = vmatpush.msra.mxu0 0.0
  %481 = vmatpush.msra.mxu0 0.0
  %482 = vmatpush.msra.mxu0 0.0
  %483 = vmatpush.msra.mxu0 0.0
  %484 = vmatpush.msra.mxu0 0.0
  %485 = vmatpush.msra.mxu0 0.0
  %486 = vmatpush.msra.mxu0 0.0
  %487 = vmatpush.msra.mxu0 0.0
  %488 = vmatpush.msra.mxu0 %v392
  %489 = vmatpush.msra.mxu0 1.0
  %490 = vmatmul.f32.gmra.mxu0 %v469
  %v491 = vpop.f32.mrf.mxu0
  %v492 = vadd.f32 0.0, %v491
  %493 = vmatmul.f32.gmra.mxu0 %v472
  %v494 = vpop.f32.mrf.mxu0
  %v495 = vadd.f32 0.0, %v494
  %496 = vdwg.mxu0
  %498 = vset.pattern.permute.xlu0 0
  %499 = vperm.xlu0 %498, %v492
  %v500 = vpop.permute.xlu0 %499
  %503 = vset.pattern.permute.xlu0 0
  %504 = vperm.xlu0 %503, %v495
  %v505 = vpop.permute.xlu0 %504
  %v507 = vperm.slane %v135, 1
  %v508 = vmul.f32 %v500, %v507
  %v509 = vmul.f32 %v505, %v507
  %v510 = vadd.f32 %v461, %v508
  %v511 = vadd.f32 %v464, %v509
  %v512 = vmul.f32 %v366, %v219
  %v513 = vmul.f32 %v381, %v220
  %v515 = vsel %vm328, %v512, 0
  %v518 = vsel %vm328, %v513, 0
  %520 = vmatpush.msra.mxu0 0.0
  %521 = vmatpush.msra.mxu0 0.0
  %522 = vmatpush.msra.mxu0 0.0
  %523 = vmatpush.msra.mxu0 0.0
  %524 = vmatpush.msra.mxu0 0.0
  %525 = vmatpush.msra.mxu0 0.0
  %526 = vmatpush.msra.mxu0 0.0
  %527 = vmatpush.msra.mxu0 0.0
  %528 = vmatpush.msra.mxu0 0.0
  %529 = vmatpush.msra.mxu0 0.0
  %530 = vmatpush.msra.mxu0 0.0
  %531 = vmatpush.msra.mxu0 0.0
  %532 = vmatpush.msra.mxu0 0.0
  %533 = vmatpush.msra.mxu0 0.0
  %534 = vmatpush.msra.mxu0 %v392
  %535 = vmatpush.msra.mxu0 1.0
  %536 = vmatmul.f32.gmra.mxu0 %v515
  %v537 = vpop.f32.mrf.mxu0
  %v538 = vadd.f32 0.0, %v537
  %539 = vmatmul.f32.gmra.mxu0 %v518
  %v540 = vpop.f32.mrf.mxu0
  %v541 = vadd.f32 0.0, %v540
  %542 = vdwg.mxu0
  %544 = vset.pattern.permute.xlu0 0
  %545 = vperm.xlu0 %544, %v538
  %v546 = vpop.permute.xlu0 %545
  %549 = vset.pattern.permute.xlu0 0
  %550 = vperm.xlu0 %549, %v541
  %v551 = vpop.permute.xlu0 %550
  %v553 = vperm.slane %v135, 2
  %v554 = vmul.f32 %v546, %v553
  %v555 = vmul.f32 %v551, %v553
  %v556 = vadd.f32 %v510, %v554
  %v557 = vadd.f32 %v511, %v555
  %v558 = vmul.f32 %v366, %v224
  %v559 = vmul.f32 %v381, %v225
  %v561 = vsel %vm328, %v558, 0
  %v564 = vsel %vm328, %v559, 0
  %566 = vmatpush.msra.mxu0 0.0
  %567 = vmatpush.msra.mxu0 0.0
  %568 = vmatpush.msra.mxu0 0.0
  %569 = vmatpush.msra.mxu0 0.0
  %570 = vmatpush.msra.mxu0 0.0
  %571 = vmatpush.msra.mxu0 0.0
  %572 = vmatpush.msra.mxu0 0.0
  %573 = vmatpush.msra.mxu0 0.0
  %574 = vmatpush.msra.mxu0 0.0
  %575 = vmatpush.msra.mxu0 0.0
  %576 = vmatpush.msra.mxu0 0.0
  %577 = vmatpush.msra.mxu0 0.0
  %578 = vmatpush.msra.mxu0 0.0
  %579 = vmatpush.msra.mxu0 0.0
  %580 = vmatpush.msra.mxu0 %v392
  %581 = vmatpush.msra.mxu0 1.0
  %582 = vmatmul.f32.gmra.mxu0 %v561
  %v583 = vpop.f32.mrf.mxu0
  %v584 = vadd.f32 0.0, %v583
  %585 = vmatmul.f32.gmra.mxu0 %v564
  %v586 = vpop.f32.mrf.mxu0
  %v587 = vadd.f32 0.0, %v586
  %588 = vdwg.mxu0
  %590 = vset.pattern.permute.xlu0 0
  %591 = vperm.xlu0 %590, %v584
  %v592 = vpop.permute.xlu0 %591
  %595 = vset.pattern.permute.xlu0 0
  %596 = vperm.xlu0 %595, %v587
  %v597 = vpop.permute.xlu0 %596
  %v599 = vperm.slane %v135, 3
  %v600 = vmul.f32 %v592, %v599
  %v601 = vmul.f32 %v597, %v599
  %v602 = vadd.f32 %v556, %v600
  %v603 = vadd.f32 %v557, %v601
  %v604 = vmul.f32 %v366, %v229
  %v605 = vmul.f32 %v381, %v230
  %v607 = vsel %vm328, %v604, 0
  %v610 = vsel %vm328, %v605, 0
  %612 = vmatpush.msra.mxu0 0.0
  %613 = vmatpush.msra.mxu0 0.0
  %614 = vmatpush.msra.mxu0 0.0
  %615 = vmatpush.msra.mxu0 0.0
  %616 = vmatpush.msra.mxu0 0.0
  %617 = vmatpush.msra.mxu0 0.0
  %618 = vmatpush.msra.mxu0 0.0
  %619 = vmatpush.msra.mxu0 0.0
  %620 = vmatpush.msra.mxu0 0.0
  %621 = vmatpush.msra.mxu0 0.0
  %622 = vmatpush.msra.mxu0 0.0
  %623 = vmatpush.msra.mxu0 0.0
  %624 = vmatpush.msra.mxu0 0.0
  %625 = vmatpush.msra.mxu0 0.0
  %626 = vmatpush.msra.mxu0 %v392
  %627 = vmatpush.msra.mxu0 1.0
  %628 = vmatmul.f32.gmra.mxu0 %v607
  %v629 = vpop.f32.mrf.mxu0
  %v630 = vadd.f32 0.0, %v629
  %631 = vmatmul.f32.gmra.mxu0 %v610
  %v632 = vpop.f32.mrf.mxu0
  %v633 = vadd.f32 0.0, %v632
  %634 = vdwg.mxu0
  %636 = vset.pattern.permute.xlu0 0
  %637 = vperm.xlu0 %636, %v630
  %v638 = vpop.permute.xlu0 %637
  %641 = vset.pattern.permute.xlu0 0
  %642 = vperm.xlu0 %641, %v633
  %v643 = vpop.permute.xlu0 %642
  %v645 = vperm.slane %v135, 4
  %v646 = vmul.f32 %v638, %v645
  %v647 = vmul.f32 %v643, %v645
  %v648 = vadd.f32 %v602, %v646
  %v649 = vadd.f32 %v603, %v647
  %650 = vrot.lane.b32.xlu0 %v169, 104
  %v651 = vpop.permute.xlu0 %650
  %652 = vrot.lane.b32.xlu0 %v172, 104
  %v653 = vpop.permute.xlu0 %652
  %v656 = vadd.f32 %v648, %v651
  %v657 = vadd.f32 %v649, %v653
  %v658 = vmax.f32 %v656, 0.0
  %v659 = vmax.f32 %v657, 0.0
  %v660 = vld [vmem:[%s10] sm:$0xff]
  %v661 = vld [vmem:[%s11] sm:$0x1]
  %v663 = vperm.slane %v661, 0
  %v666 = vsel %vm174, %v658, 0
  %v669 = vsel %vm174, %v659, 0
  %671 = vmatpush.msra.mxu0 0.0
  %672 = vmatpush.msra.mxu0 0.0
  %673 = vmatpush.msra.mxu0 0.0
  %674 = vmatpush.msra.mxu0 0.0
  %675 = vmatpush.msra.mxu0 0.0
  %676 = vmatpush.msra.mxu0 0.0
  %677 = vmatpush.msra.mxu0 0.0
  %678 = vmatpush.msra.mxu0 0.0
  %679 = vmatpush.msra.mxu0 0.0
  %680 = vmatpush.msra.mxu0 0.0
  %681 = vmatpush.msra.mxu0 0.0
  %682 = vmatpush.msra.mxu0 0.0
  %683 = vmatpush.msra.mxu0 0.0
  %684 = vmatpush.msra.mxu0 0.0
  %685 = vmatpush.msra.mxu0 0.0
  %686 = vmatpush.msra.mxu0 %v660
  %687 = vmatmul.f32.gmra.mxu0 %v666
  %v688 = vpop.f32.mrf.mxu0
  %v689 = vadd.f32 %v663, %v688
  %690 = vmatmul.f32.gmra.mxu0 %v669
  %v691 = vpop.f32.mrf.mxu0
  %v692 = vadd.f32 %v663, %v691
  %693 = vdwg.mxu0
  %v694 = vsel %vm75, %v689, -inf
  %695 = vmax.xlane.f32.xlu0 %v694
  %v696 = vpop.xlane.xlu0 %695
  %v697 = vsel %vm77, %v692, -inf
  %698 = vmax.xlane.f32.xlu0 %v697
  %v699 = vpop.xlane.xlu0 %698
  %v700 = vsub.f32 %v689, %v696
  %v701 = vsub.f32 %v692, %v699
  %v702 = vmul.f32 %v700, 1.442695
  %v703 = vpow.pop %v702
  %v704 = vmul.f32 %v701, 1.442695
  %v705 = vpow.pop %v704
  %v706 = vsel %vm75, %v703, 0.0
  %707 = vadd.xlane.f32.xlu0 %v706
  %v708 = vpop.xlane.xlu0 %707
  %v709 = vsel %vm77, %v705, 0.0
  %710 = vadd.xlane.f32.xlu0 %v709
  %v711 = vpop.xlane.xlu0 %710
  %v712 = vrcp.pop %v708
  %v713 = vmul.f32 %v708, %v712
  %v714 = vsub.f32 1.0, %v713
  %v715 = vmul.f32 %v712, %v714
  %v716 = vadd.f32 %v712, %v715
  %vm717 = vweird.f32 %v708
  %vm718 = vweird.f32 %v712
  %vm719 = vmor %vm717, %vm718
  %v720 = vsel %vm719, %v712, %v716
  %v721 = vand.u32 2147483647, %v708
  %vm722 = vcmp.eq.f32.partialorder %v721, 8.507059e+37
  %v723 = vand.u32 %v708, 2147483648
  %v724 = vor.u32 1.1754944e-38, %v723
  %v725 = vsel %vm722, %v724, %v720
  %v726 = vmul.f32 %v703, %v725
  %v727 = vrcp.pop %v711
  %v728 = vmul.f32 %v711, %v727
  %v729 = vsub.f32 1.0, %v728
  %v730 = vmul.f32 %v727, %v729
  %v731 = vadd.f32 %v727, %v730
  %vm732 = vweird.f32 %v711
  %vm733 = vweird.f32 %v727
  %vm734 = vmor %vm732, %vm733
  %v735 = vsel %vm734, %v727, %v731
  %v736 = vand.u32 2147483647, %v711
  %vm737 = vcmp.eq.f32.partialorder %v736, 8.507059e+37
  %v738 = vand.u32 %v711, 2147483648
  %v739 = vor.u32 1.1754944e-38, %v738
  %v740 = vsel %vm737, %v739, %v735
  %v741 = vmul.f32 %v705, %v740
  %v742 = vld [vmem:[%s12] sm:$0xff]
  %v743 = vld [vmem:[%s12 + $0x8] sm:$0xff]
  %v744 = vld [vmem:[%s13] sm:$0x1]
  %v745 = vld [vmem:[%s16] sm:$0xff]
  %v746 = vld [vmem:[%s16 + $0x8] sm:$0xff]
  %v747 = vld [vmem:[%s17] sm:$0x1]
  %v748 = vld [vmem:[%s3] sm:$0x3f]
  %v750 = vsel %vm328, %v748, 0
  %v752 = vsel %vm390, %v659, 0
  %754 = vmatpush.msra.mxu0 0.0
  %755 = vmatpush.msra.mxu0 0.0
  %756 = vmatpush.msra.mxu0 0.0
  %757 = vmatpush.msra.mxu0 0.0
  %758 = vmatpush.msra.mxu0 0.0
  %759 = vmatpush.msra.mxu0 0.0
  %760 = vmatpush.msra.mxu0 0.0
  %761 = vmatpush.msra.mxu0 0.0
  %762 = vmatpush.msra.mxu0 0.0
  %763 = vmatpush.msra.mxu0 0.0
  %764 = vmatpush.msra.mxu0 0.0
  %765 = vmatpush.msra.mxu0 0.0
  %766 = vmatpush.msra.mxu0 0.0
  %767 = vmatpush.msra.mxu0 0.0
  %768 = vmatpush.msra.mxu0 %v752
  %769 = vmatpush.msra.mxu0 %v658
  %770 = vmatmul.f32.gmra.mxu0 %v750
  %v771 = vpop.f32.mrf.mxu0
  %v772 = vadd.f32 0.0, %v771
  %773 = vdwg.mxu0
  %v775 = vsel %vm390, %v741, 0
  %777 = vmatpush.msra.mxu0 0.0
  %778 = vmatpush.msra.mxu0 0.0
  %779 = vmatpush.msra.mxu0 0.0
  %780 = vmatpush.msra.mxu0 0.0
  %781 = vmatpush.msra.mxu0 0.0
  %782 = vmatpush.msra.mxu0 0.0
  %783 = vmatpush.msra.mxu0 0.0
  %784 = vmatpush.msra.mxu0 0.0
  %785 = vmatpush.msra.mxu0 0.0
  %786 = vmatpush.msra.mxu0 0.0
  %787 = vmatpush.msra.mxu0 0.0
  %788 = vmatpush.msra.mxu0 0.0
  %789 = vmatpush.msra.mxu0 0.0
  %790 = vmatpush.msra.mxu0 0.0
  %791 = vmatpush.msra.mxu0 %v775
  %792 = vmatpush.msra.mxu0 %v726
  %793 = vmatmul.f32.gmra.mxu0 %v750
  %v794 = vpop.f32.mrf.mxu0
  %v795 = vadd.f32 0.0, %v794
  %796 = vdwg.mxu0
  %v797 = vld [vmem:[%s4] sm:$0x3f]
  %798 = vxpose.xlu0.b32.start [1/16] %v795, 128
  %799 = vxpose.xlu0.b32.cont [2/16] 0.0, 128
  %800 = vxpose.xlu0.b32.cont [3/16] 0.0, 128
  %801 = vxpose.xlu0.b32.cont [4/16] 0.0, 128
  %802 = vxpose.xlu0.b32.cont [5/16] 0.0, 128
  %803 = vxpose.xlu0.b32.cont [6/16] 0.0, 128
  %804 = vxpose.xlu0.b32.cont [7/16] 0.0, 128
  %805 = vxpose.xlu0.b32.cont [8/16] 0.0, 128
  %806 = vxpose.xlu0.b32.cont [9/16] 0.0, 128
  %807 = vxpose.xlu0.b32.cont [10/16] 0.0, 128
  %808 = vxpose.xlu0.b32.cont [11/16] 0.0, 128
  %809 = vxpose.xlu0.b32.cont [12/16] 0.0, 128
  %810 = vxpose.xlu0.b32.cont [13/16] 0.0, 128
  %811 = vxpose.xlu0.b32.cont [14/16] 0.0, 128
  %812 = vxpose.xlu0.b32.cont [15/16] 0.0, 128
  %813 = vxpose.xlu0.b32.end [16/16] 0.0, 128
  %v814 = vpop.trf.xlu0
  %v815 = vpop.trf.xlu0
  %v816 = vpop.trf.xlu0
  %v817 = vpop.trf.xlu0
  %v818 = vpop.trf.xlu0
  %v819 = vpop.trf.xlu0
  %v820 = vpop.trf.xlu0
  %v821 = vpop.trf.xlu0
  %v822 = vpop.trf.xlu0
  %v823 = vpop.trf.xlu0
  %v824 = vpop.trf.xlu0
  %v825 = vpop.trf.xlu0
  %v826 = vpop.trf.xlu0
  %v827 = vpop.trf.xlu0
  %v828 = vpop.trf.xlu0
  %v829 = vpop.trf.xlu0
  %vm830 = vcmask 48128
  %v832 = vsel %vm830, %v814, 0
  %vm834 = vcmask 1045504
  %v836 = vsel %vm834, %v772, 0
  %838 = vmatpush.msra.mxu0 0.0
  %839 = vmatpush.msra.mxu0 0.0
  %840 = vmatpush.msra.mxu0 0.0
  %841 = vmatpush.msra.mxu0 0.0
  %842 = vmatpush.msra.mxu0 0.0
  %843 = vmatpush.msra.mxu0 0.0
  %844 = vmatpush.msra.mxu0 0.0
  %845 = vmatpush.msra.mxu0 0.0
  %846 = vmatpush.msra.mxu0 0.0
  %847 = vmatpush.msra.mxu0 0.0
  %848 = vmatpush.msra.mxu0 0.0
  %849 = vmatpush.msra.mxu0 0.0
  %850 = vmatpush.msra.mxu0 0.0
  %851 = vmatpush.msra.mxu0 0.0
  %852 = vmatpush.msra.mxu0 0.0
  %853 = vmatpush.msra.mxu0 %v836
  %854 = vmatmul.f32.gmra.mxu0 %v832
  %v855 = vpop.f32.mrf.mxu0
  %v856 = vadd.f32 0.0, %v855
  %857 = vdwg.mxu0
  %v859 = vsel %vm834, %v797, 0
  %861 = vmatpush.msra.mxu0 0.0
  %862 = vmatpush.msra.mxu0 0.0
  %863 = vmatpush.msra.mxu0 0.0
  %864 = vmatpush.msra.mxu0 0.0
  %865 = vmatpush.msra.mxu0 0.0
  %866 = vmatpush.msra.mxu0 0.0
  %867 = vmatpush.msra.mxu0 0.0
  %868 = vmatpush.msra.mxu0 0.0
  %869 = vmatpush.msra.mxu0 0.0
  %870 = vmatpush.msra.mxu0 0.0
  %871 = vmatpush.msra.mxu0 0.0
  %872 = vmatpush.msra.mxu0 0.0
  %873 = vmatpush.msra.mxu0 0.0
  %874 = vmatpush.msra.mxu0 0.0
  %875 = vmatpush.msra.mxu0 0.0
  %876 = vmatpush.msra.mxu0 %v859
  %877 = vmatmul.f32.gmra.mxu0 %v832
  %v878 = vpop.f32.mrf.mxu0
  %v879 = vadd.f32 0.0, %v878
  %880 = vdwg.mxu0
  %v882 = vsel %vm830, %v879, 0
  %v885 = vsel %vm834, %v795, 0
  %887 = vmatpush.msra.mxu0 0.0
  %888 = vmatpush.msra.mxu0 0.0
  %889 = vmatpush.msra.mxu0 0.0
  %890 = vmatpush.msra.mxu0 0.0
  %891 = vmatpush.msra.mxu0 0.0
  %892 = vmatpush.msra.mxu0 0.0
  %893 = vmatpush.msra.mxu0 0.0
  %894 = vmatpush.msra.mxu0 0.0
  %895 = vmatpush.msra.mxu0 0.0
  %896 = vmatpush.msra.mxu0 0.0
  %897 = vmatpush.msra.mxu0 0.0
  %898 = vmatpush.msra.mxu0 0.0
  %899 = vmatpush.msra.mxu0 0.0
  %900 = vmatpush.msra.mxu0 0.0
  %901 = vmatpush.msra.mxu0 0.0
  %902 = vmatpush.msra.mxu0 %v885
  %903 = vmatmul.f32.gmra.mxu0 %v882
  %v904 = vpop.f32.mrf.mxu0
  %v905 = vadd.f32 0.0, %v904
  %906 = vdwg.mxu0
  %v907 = vlaneseq
  %v908 = vshrl.u32 %v907, 7
  %v909 = vlaneseq
  %v910 = vand.u32 %v909, 127
  %vm911 = vcmp.eq.s32.totalorder %v908, %v910
  %v912 = vsel %vm911, 0.0, %v905
  %vm913 = vcmask 27648
  %v914 = vsel %vm913, %v912, 0.0
  %915 = vadd.xlane.f32.xlu0 %v914
  %v916 = vpop.xlane.xlu0 %915
  %v917 = vadd.f32 %v916, 1e-15
  %v918 = vrsqrt.pop %v917
  %v919 = vmul.f32 %v918, %v917
  %v920 = vmul.f32 %v919, %v918
  %v921 = vmul.f32 0.5, %v920
  %v922 = vsub.f32 1.5, %v921
  %v923 = vmul.f32 %v918, %v922
  %vm924 = vweird.f32 %v917
  %vm925 = vweird.f32 %v918
  %vm926 = vmor %vm924, %vm925
  %v927 = vsel %vm926, %v918, %v923
  %v928 = vmul.f32 %v912, %v927
  %929 = vxpose.xlu0.b32.start [1/16] %v927, 128
  %930 = vxpose.xlu0.b32.cont [2/16] 0.0, 128
  %931 = vxpose.xlu0.b32.cont [3/16] 0.0, 128
  %932 = vxpose.xlu0.b32.cont [4/16] 0.0, 128
  %933 = vxpose.xlu0.b32.cont [5/16] 0.0, 128
  %934 = vxpose.xlu0.b32.cont [6/16] 0.0, 128
  %935 = vxpose.xlu0.b32.cont [7/16] 0.0, 128
  %936 = vxpose.xlu0.b32.cont [8/16] 0.0, 128
  %937 = vxpose.xlu0.b32.cont [9/16] 0.0, 128
  %938 = vxpose.xlu0.b32.cont [10/16] 0.0, 128
  %939 = vxpose.xlu0.b32.cont [11/16] 0.0, 128
  %940 = vxpose.xlu0.b32.cont [12/16] 0.0, 128
  %941 = vxpose.xlu0.b32.cont [13/16] 0.0, 128
  %942 = vxpose.xlu0.b32.cont [14/16] 0.0, 128
  %943 = vxpose.xlu0.b32.cont [15/16] 0.0, 128
  %944 = vxpose.xlu0.b32.end [16/16] 0.0, 128
  %v945 = vpop.trf.xlu0
  %v946 = vpop.trf.xlu0
  %v947 = vpop.trf.xlu0
  %v948 = vpop.trf.xlu0
  %v949 = vpop.trf.xlu0
  %v950 = vpop.trf.xlu0
  %v951 = vpop.trf.xlu0
  %v952 = vpop.trf.xlu0
  %v953 = vpop.trf.xlu0
  %v954 = vpop.trf.xlu0
  %v955 = vpop.trf.xlu0
  %v956 = vpop.trf.xlu0
  %v957 = vpop.trf.xlu0
  %v958 = vpop.trf.xlu0
  %v959 = vpop.trf.xlu0
  %v960 = vpop.trf.xlu0
  %v961 = vperm.slane %v945, 0
  %v962 = vmul.f32 %v928, %v961
  %v964 = vsel %vm75, %v962, 0
  %v967 = vsel %vm147, %v856, 0
  %969 = vmatpush.msra.mxu0 0.0
  %970 = vmatpush.msra.mxu0 0.0
  %971 = vmatpush.msra.mxu0 0.0
  %972 = vmatpush.msra.mxu0 0.0
  %973 = vmatpush.msra.mxu0 0.0
  %974 = vmatpush.msra.mxu0 0.0
  %975 = vmatpush.msra.mxu0 0.0
  %976 = vmatpush.msra.mxu0 0.0
  %977 = vmatpush.msra.mxu0 0.0
  %978 = vmatpush.msra.mxu0 0.0
  %979 = vmatpush.msra.mxu0 0.0
  %980 = vmatpush.msra.mxu0 0.0
  %981 = vmatpush.msra.mxu0 0.0
  %982 = vmatpush.msra.mxu0 0.0
  %983 = vmatpush.msra.mxu0 0.0
  %984 = vmatpush.msra.mxu0 %v967
  %985 = vmatmul.f32.gmra.mxu0 %v964
  %v986 = vpop.f32.mrf.mxu0
  %v987 = vadd.f32 0.0, %v986
  %988 = vdwg.mxu0
  %989 = vrot.lane.b32.xlu0 %v856, 8
  %v990 = vpop.permute.xlu0 %989
  %v992 = vsel %vm174, %v987, %v990
  %v994 = vperm.slane %v744, 0
  %vm996 = vcmask 130048
  %v998 = vsel %vm996, %v992, 0
  %1000 = vmatpush.msra.mxu0 0.0
  %1001 = vmatpush.msra.mxu0 0.0
  %1002 = vmatpush.msra.mxu0 0.0
  %1003 = vmatpush.msra.mxu0 0.0
  %1004 = vmatpush.msra.mxu0 0.0
  %1005 = vmatpush.msra.mxu0 0.0
  %1006 = vmatpush.msra.mxu0 0.0
  %1007 = vmatpush.msra.mxu0 0.0
  %1008 = vmatpush.msra.mxu0 0.0
  %1009 = vmatpush.msra.mxu0 0.0
  %1010 = vmatpush.msra.mxu0 0.0
  %1011 = vmatpush.msra.mxu0 0.0
  %1012 = vmatpush.msra.mxu0 0.0
  %1013 = vmatpush.msra.mxu0 0.0
  %1014 = vmatpush.msra.mxu0 %v743
  %1015 = vmatpush.msra.mxu0 %v742
  %1016 = vmatmul.f32.gmra.mxu0 %v998
  %v1017 = vpop.f32.mrf.mxu0
  %v1018 = vadd.f32 %v994, %v1017
  %1019 = vdwg.mxu0
  %v1020 = vmax.f32 %v1018, 0.0
  %s1021 = scalar_lea.vmem %s3, 8
  %v1022 = vld [vmem:[%s1021] sm:$0x3f]
  %v1024 = vsel %vm328, %v1022, 0
  %1026 = vmatpush.msra.mxu0 0.0
  %1027 = vmatpush.msra.mxu0 0.0
  %1028 = vmatpush.msra.mxu0 0.0
  %1029 = vmatpush.msra.mxu0 0.0
  %1030 = vmatpush.msra.mxu0 0.0
  %1031 = vmatpush.msra.mxu0 0.0
  %1032 = vmatpush.msra.mxu0 0.0
  %1033 = vmatpush.msra.mxu0 0.0
  %1034 = vmatpush.msra.mxu0 0.0
  %1035 = vmatpush.msra.mxu0 0.0
  %1036 = vmatpush.msra.mxu0 0.0
  %1037 = vmatpush.msra.mxu0 0.0
  %1038 = vmatpush.msra.mxu0 0.0
  %1039 = vmatpush.msra.mxu0 0.0
  %1040 = vmatpush.msra.mxu0 %v752
  %1041 = vmatpush.msra.mxu0 %v658
  %1042 = vmatmul.f32.gmra.mxu0 %v1024
  %v1043 = vpop.f32.mrf.mxu0
  %v1044 = vadd.f32 0.0, %v1043
  %1045 = vdwg.mxu0
  %1046 = vmatpush.msra.mxu0 0.0
  %1047 = vmatpush.msra.mxu0 0.0
  %1048 = vmatpush.msra.mxu0 0.0
  %1049 = vmatpush.msra.mxu0 0.0
  %1050 = vmatpush.msra.mxu0 0.0
  %1051 = vmatpush.msra.mxu0 0.0
  %1052 = vmatpush.msra.mxu0 0.0
  %1053 = vmatpush.msra.mxu0 0.0
  %1054 = vmatpush.msra.mxu0 0.0
  %1055 = vmatpush.msra.mxu0 0.0
  %1056 = vmatpush.msra.mxu0 0.0
  %1057 = vmatpush.msra.mxu0 0.0
  %1058 = vmatpush.msra.mxu0 0.0
  %1059 = vmatpush.msra.mxu0 0.0
  %1060 = vmatpush.msra.mxu0 %v775
  %1061 = vmatpush.msra.mxu0 %v726
  %1062 = vmatmul.f32.gmra.mxu0 %v1024
  %v1063 = vpop.f32.mrf.mxu0
  %v1064 = vadd.f32 0.0, %v1063
  %1065 = vdwg.mxu0
  %s1066 = scalar_lea.vmem %s4, 8
  %v1067 = vld [vmem:[%s1066] sm:$0x3f]
  %1068 = vxpose.xlu0.b32.start [1/16] %v1064, 128
  %1069 = vxpose.xlu0.b32.cont [2/16] 0.0, 128
  %1070 = vxpose.xlu0.b32.cont [3/16] 0.0, 128
  %1071 = vxpose.xlu0.b32.cont [4/16] 0.0, 128
  %1072 = vxpose.xlu0.b32.cont [5/16] 0.0, 128
  %1073 = vxpose.xlu0.b32.cont [6/16] 0.0, 128
  %1074 = vxpose.xlu0.b32.cont [7/16] 0.0, 128
  %1075 = vxpose.xlu0.b32.cont [8/16] 0.0, 128
  %1076 = vxpose.xlu0.b32.cont [9/16] 0.0, 128
  %1077 = vxpose.xlu0.b32.cont [10/16] 0.0, 128
  %1078 = vxpose.xlu0.b32.cont [11/16] 0.0, 128
  %1079 = vxpose.xlu0.b32.cont [12/16] 0.0, 128
  %1080 = vxpose.xlu0.b32.cont [13/16] 0.0, 128
  %1081 = vxpose.xlu0.b32.cont [14/16] 0.0, 128
  %1082 = vxpose.xlu0.b32.cont [15/16] 0.0, 128
  %1083 = vxpose.xlu0.b32.end [16/16] 0.0, 128
  %v1084 = vpop.trf.xlu0
  %v1085 = vpop.trf.xlu0
  %v1086 = vpop.trf.xlu0
  %v1087 = vpop.trf.xlu0
  %v1088 = vpop.trf.xlu0
  %v1089 = vpop.trf.xlu0
  %v1090 = vpop.trf.xlu0
  %v1091 = vpop.trf.xlu0
  %v1092 = vpop.trf.xlu0
  %v1093 = vpop.trf.xlu0
  %v1094 = vpop.trf.xlu0
  %v1095 = vpop.trf.xlu0
  %v1096 = vpop.trf.xlu0
  %v1097 = vpop.trf.xlu0
  %v1098 = vpop.trf.xlu0
  %v1099 = vpop.trf.xlu0
  %v1101 = vsel %vm830, %v1084, 0
  %v1104 = vsel %vm834, %v1044, 0
  %1106 = vmatpush.msra.mxu0 0.0
  %1107 = vmatpush.msra.mxu0 0.0
  %1108 = vmatpush.msra.mxu0 0.0
  %1109 = vmatpush.msra.mxu0 0.0
  %1110 = vmatpush.msra.mxu0 0.0
  %1111 = vmatpush.msra.mxu0 0.0
  %1112 = vmatpush.msra.mxu0 0.0
  %1113 = vmatpush.msra.mxu0 0.0
  %1114 = vmatpush.msra.mxu0 0.0
  %1115 = vmatpush.msra.mxu0 0.0
  %1116 = vmatpush.msra.mxu0 0.0
  %1117 = vmatpush.msra.mxu0 0.0
  %1118 = vmatpush.msra.mxu0 0.0
  %1119 = vmatpush.msra.mxu0 0.0
  %1120 = vmatpush.msra.mxu0 0.0
  %1121 = vmatpush.msra.mxu0 %v1104
  %1122 = vmatmul.f32.gmra.mxu0 %v1101
  %v1123 = vpop.f32.mrf.mxu0
  %v1124 = vadd.f32 0.0, %v1123
  %1125 = vdwg.mxu0
  %v1127 = vsel %vm834, %v1067, 0
  %1129 = vmatpush.msra.mxu0 0.0
  %1130 = vmatpush.msra.mxu0 0.0
  %1131 = vmatpush.msra.mxu0 0.0
  %1132 = vmatpush.msra.mxu0 0.0
  %1133 = vmatpush.msra.mxu0 0.0
  %1134 = vmatpush.msra.mxu0 0.0
  %1135 = vmatpush.msra.mxu0 0.0
  %1136 = vmatpush.msra.mxu0 0.0
  %1137 = vmatpush.msra.mxu0 0.0
  %1138 = vmatpush.msra.mxu0 0.0
  %1139 = vmatpush.msra.mxu0 0.0
  %1140 = vmatpush.msra.mxu0 0.0
  %1141 = vmatpush.msra.mxu0 0.0
  %1142 = vmatpush.msra.mxu0 0.0
  %1143 = vmatpush.msra.mxu0 0.0
  %1144 = vmatpush.msra.mxu0 %v1127
  %1145 = vmatmul.f32.gmra.mxu0 %v1101
  %v1146 = vpop.f32.mrf.mxu0
  %v1147 = vadd.f32 0.0, %v1146
  %1148 = vdwg.mxu0
  %v1150 = vsel %vm830, %v1147, 0
  %v1153 = vsel %vm834, %v1064, 0
  %1155 = vmatpush.msra.mxu0 0.0
  %1156 = vmatpush.msra.mxu0 0.0
  %1157 = vmatpush.msra.mxu0 0.0
  %1158 = vmatpush.msra.mxu0 0.0
  %1159 = vmatpush.msra.mxu0 0.0
  %1160 = vmatpush.msra.mxu0 0.0
  %1161 = vmatpush.msra.mxu0 0.0
  %1162 = vmatpush.msra.mxu0 0.0
  %1163 = vmatpush.msra.mxu0 0.0
  %1164 = vmatpush.msra.mxu0 0.0
  %1165 = vmatpush.msra.mxu0 0.0
  %1166 = vmatpush.msra.mxu0 0.0
  %1167 = vmatpush.msra.mxu0 0.0
  %1168 = vmatpush.msra.mxu0 0.0
  %1169 = vmatpush.msra.mxu0 0.0
  %1170 = vmatpush.msra.mxu0 %v1153
  %1171 = vmatmul.f32.gmra.mxu0 %v1150
  %v1172 = vpop.f32.mrf.mxu0
  %v1173 = vadd.f32 0.0, %v1172
  %1174 = vdwg.mxu0
  %v1175 = vsel %vm911, 0.0, %v1173
  %v1176 = vsel %vm913, %v1175, 0.0
  %1177 = vadd.xlane.f32.xlu0 %v1176
  %v1178 = vpop.xlane.xlu0 %1177
  %v1179 = vadd.f32 %v1178, 1e-15
  %v1180 = vrsqrt.pop %v1179
  %v1181 = vmul.f32 %v1180, %v1179
  %v1182 = vmul.f32 %v1181, %v1180
  %v1183 = vmul.f32 0.5, %v1182
  %v1184 = vsub.f32 1.5, %v1183
  %v1185 = vmul.f32 %v1180, %v1184
  %vm1186 = vweird.f32 %v1179
  %vm1187 = vweird.f32 %v1180
  %vm1188 = vmor %vm1186, %vm1187
  %v1189 = vsel %vm1188, %v1180, %v1185
  %v1190 = vmul.f32 %v1175, %v1189
  %1191 = vxpose.xlu0.b32.start [1/16] %v1189, 128
  %1192 = vxpose.xlu0.b32.cont [2/16] 0.0, 128
  %1193 = vxpose.xlu0.b32.cont [3/16] 0.0, 128
  %1194 = vxpose.xlu0.b32.cont [4/16] 0.0, 128
  %1195 = vxpose.xlu0.b32.cont [5/16] 0.0, 128
  %1196 = vxpose.xlu0.b32.cont [6/16] 0.0, 128
  %1197 = vxpose.xlu0.b32.cont [7/16] 0.0, 128
  %1198 = vxpose.xlu0.b32.cont [8/16] 0.0, 128
  %1199 = vxpose.xlu0.b32.cont [9/16] 0.0, 128
  %1200 = vxpose.xlu0.b32.cont [10/16] 0.0, 128
  %1201 = vxpose.xlu0.b32.cont [11/16] 0.0, 128
  %1202 = vxpose.xlu0.b32.cont [12/16] 0.0, 128
  %1203 = vxpose.xlu0.b32.cont [13/16] 0.0, 128
  %1204 = vxpose.xlu0.b32.cont [14/16] 0.0, 128
  %1205 = vxpose.xlu0.b32.cont [15/16] 0.0, 128
  %1206 = vxpose.xlu0.b32.end [16/16] 0.0, 128
  %v1207 = vpop.trf.xlu0
  %v1208 = vpop.trf.xlu0
  %v1209 = vpop.trf.xlu0
  %v1210 = vpop.trf.xlu0
  %v1211 = vpop.trf.xlu0
  %v1212 = vpop.trf.xlu0
  %v1213 = vpop.trf.xlu0
  %v1214 = vpop.trf.xlu0
  %v1215 = vpop.trf.xlu0
  %v1216 = vpop.trf.xlu0
  %v1217 = vpop.trf.xlu0
  %v1218 = vpop.trf.xlu0
  %v1219 = vpop.trf.xlu0
  %v1220 = vpop.trf.xlu0
  %v1221 = vpop.trf.xlu0
  %v1222 = vpop.trf.xlu0
  %v1223 = vperm.slane %v1207, 0
  %v1224 = vmul.f32 %v1190, %v1223
  %v1226 = vsel %vm75, %v1224, 0
  %v1229 = vsel %vm147, %v1124, 0
  %1231 = vmatpush.msra.mxu0 0.0
  %1232 = vmatpush.msra.mxu0 0.0
  %1233 = vmatpush.msra.mxu0 0.0
  %1234 = vmatpush.msra.mxu0 0.0
  %1235 = vmatpush.msra.mxu0 0.0
  %1236 = vmatpush.msra.mxu0 0.0
  %1237 = vmatpush.msra.mxu0 0.0
  %1238 = vmatpush.msra.mxu0 0.0
  %1239 = vmatpush.msra.mxu0 0.0
  %1240 = vmatpush.msra.mxu0 0.0
  %1241 = vmatpush.msra.mxu0 0.0
  %1242 = vmatpush.msra.mxu0 0.0
  %1243 = vmatpush.msra.mxu0 0.0
  %1244 = vmatpush.msra.mxu0 0.0
  %1245 = vmatpush.msra.mxu0 0.0
  %1246 = vmatpush.msra.mxu0 %v1229
  %1247 = vmatmul.f32.gmra.mxu0 %v1226
  %v1248 = vpop.f32.mrf.mxu0
  %v1249 = vadd.f32 0.0, %v1248
  %1250 = vdwg.mxu0
  %1251 = vrot.lane.b32.xlu0 %v1124, 8
  %v1252 = vpop.permute.xlu0 %1251
  %v1254 = vsel %vm174, %v1249, %v1252
  %v1256 = vsel %vm996, %v1254, 0
  %1258 = vmatpush.msra.mxu0 0.0
  %1259 = vmatpush.msra.mxu0 0.0
  %1260 = vmatpush.msra.mxu0 0.0
  %1261 = vmatpush.msra.mxu0 0.0
  %1262 = vmatpush.msra.mxu0 0.0
  %1263 = vmatpush.msra.mxu0 0.0
  %1264 = vmatpush.msra.mxu0 0.0
  %1265 = vmatpush.msra.mxu0 0.0
  %1266 = vmatpush.msra.mxu0 0.0
  %1267 = vmatpush.msra.mxu0 0.0
  %1268 = vmatpush.msra.mxu0 0.0
  %1269 = vmatpush.msra.mxu0 0.0
  %1270 = vmatpush.msra.mxu0 0.0
  %1271 = vmatpush.msra.mxu0 0.0
  %1272 = vmatpush.msra.mxu0 %v743
  %1273 = vmatpush.msra.mxu0 %v742
  %1274 = vmatmul.f32.gmra.mxu0 %v1256
  %v1275 = vpop.f32.mrf.mxu0
  %v1276 = vadd.f32 %v994, %v1275
  %1277 = vdwg.mxu0
  %v1278 = vmax.f32 %v1276, 0.0
  %v1280 = vrot.slane %v1278, 4
  %v1282 = vsel %vm147, %v1020, %v1280
  %v1283 = vld [vmem:[%s14] sm:$0xff]
  %v1284 = vld [vmem:[%s15] sm:$0x1]
  %v1286 = vperm.slane %v1284, 0
  %v1289 = vsel %vm174, %v1282, 0
  %1291 = vmatpush.msra.mxu0 0.0
  %1292 = vmatpush.msra.mxu0 0.0
  %1293 = vmatpush.msra.mxu0 0.0
  %1294 = vmatpush.msra.mxu0 0.0
  %1295 = vmatpush.msra.mxu0 0.0
  %1296 = vmatpush.msra.mxu0 0.0
  %1297 = vmatpush.msra.mxu0 0.0
  %1298 = vmatpush.msra.mxu0 0.0
  %1299 = vmatpush.msra.mxu0 0.0
  %1300 = vmatpush.msra.mxu0 0.0
  %1301 = vmatpush.msra.mxu0 0.0
  %1302 = vmatpush.msra.mxu0 0.0
  %1303 = vmatpush.msra.mxu0 0.0
  %1304 = vmatpush.msra.mxu0 0.0
  %1305 = vmatpush.msra.mxu0 0.0
  %1306 = vmatpush.msra.mxu0 %v1283
  %1307 = vmatmul.f32.gmra.mxu0 %v1289
  %v1308 = vpop.f32.mrf.mxu0
  %v1309 = vadd.f32 %v1286, %v1308
  %1310 = vdwg.mxu0
  %vm1311 = vcmask 15360
  %v1312 = vsel %vm1311, %v1309, -inf
  %1313 = vmax.xlane.f32.xlu0 %v1312
  %v1314 = vpop.xlane.xlu0 %1313
  %v1315 = vsub.f32 %v1309, %v1314
  %v1316 = vmul.f32 %v1315, 1.442695
  %v1317 = vpow.pop %v1316
  %v1318 = vsel %vm1311, %v1317, 0.0
  %1319 = vadd.xlane.f32.xlu0 %v1318
  %v1320 = vpop.xlane.xlu0 %1319
  %v1321 = vrcp.pop %v1320
  %v1322 = vmul.f32 %v1320, %v1321
  %v1323 = vsub.f32 1.0, %v1322
  %v1324 = vmul.f32 %v1321, %v1323
  %v1325 = vadd.f32 %v1321, %v1324
  %vm1326 = vweird.f32 %v1320
  %vm1327 = vweird.f32 %v1321
  %vm1328 = vmor %vm1326, %vm1327
  %v1329 = vsel %vm1328, %v1321, %v1325
  %v1330 = vand.u32 2147483647, %v1320
  %vm1331 = vcmp.eq.f32.partialorder %v1330, 8.507059e+37
  %v1332 = vand.u32 %v1320, 2147483648
  %v1333 = vor.u32 1.1754944e-38, %v1332
  %v1334 = vsel %vm1331, %v1333, %v1329
  %v1335 = vmul.f32 %v1317, %v1334
  %1336 = vxpose.xlu0.b32.start [1/16] %v1335, 128
  %1337 = vxpose.xlu0.b32.cont [2/16] 0.0, 128
  %1338 = vxpose.xlu0.b32.cont [3/16] 0.0, 128
  %1339 = vxpose.xlu0.b32.cont [4/16] 0.0, 128
  %1340 = vxpose.xlu0.b32.cont [5/16] 0.0, 128
  %1341 = vxpose.xlu0.b32.cont [6/16] 0.0, 128
  %1342 = vxpose.xlu0.b32.cont [7/16] 0.0, 128
  %1343 = vxpose.xlu0.b32.cont [8/16] 0.0, 128
  %1344 = vxpose.xlu0.b32.cont [9/16] 0.0, 128
  %1345 = vxpose.xlu0.b32.cont [10/16] 0.0, 128
  %1346 = vxpose.xlu0.b32.cont [11/16] 0.0, 128
  %1347 = vxpose.xlu0.b32.cont [12/16] 0.0, 128
  %1348 = vxpose.xlu0.b32.cont [13/16] 0.0, 128
  %1349 = vxpose.xlu0.b32.cont [14/16] 0.0, 128
  %1350 = vxpose.xlu0.b32.cont [15/16] 0.0, 128
  %1351 = vxpose.xlu0.b32.end [16/16] 0.0, 128
  %v1352 = vpop.trf.xlu0
  %v1353 = vpop.trf.xlu0
  %v1354 = vpop.trf.xlu0
  %v1355 = vpop.trf.xlu0
  %v1356 = vpop.trf.xlu0
  %v1357 = vpop.trf.xlu0
  %v1358 = vpop.trf.xlu0
  %v1359 = vpop.trf.xlu0
  %v1360 = vpop.trf.xlu0
  %v1361 = vpop.trf.xlu0
  %v1362 = vpop.trf.xlu0
  %v1363 = vpop.trf.xlu0
  %v1364 = vpop.trf.xlu0
  %v1365 = vpop.trf.xlu0
  %v1366 = vpop.trf.xlu0
  %v1367 = vpop.trf.xlu0
  %v1369 = vsel %vm75, %v1352, 0
  %v1372 = vsel %vm147, %v1020, 0
  %1374 = vmatpush.msra.mxu0 0.0
  %1375 = vmatpush.msra.mxu0 0.0
  %1376 = vmatpush.msra.mxu0 0.0
  %1377 = vmatpush.msra.mxu0 0.0
  %1378 = vmatpush.msra.mxu0 0.0
  %1379 = vmatpush.msra.mxu0 0.0
  %1380 = vmatpush.msra.mxu0 0.0
  %1381 = vmatpush.msra.mxu0 0.0
  %1382 = vmatpush.msra.mxu0 0.0
  %1383 = vmatpush.msra.mxu0 0.0
  %1384 = vmatpush.msra.mxu0 0.0
  %1385 = vmatpush.msra.mxu0 0.0
  %1386 = vmatpush.msra.mxu0 0.0
  %1387 = vmatpush.msra.mxu0 0.0
  %1388 = vmatpush.msra.mxu0 0.0
  %1389 = vmatpush.msra.mxu0 %v1372
  %1390 = vmatmul.f32.gmra.mxu0 %v1369
  %v1391 = vpop.f32.mrf.mxu0
  %v1392 = vadd.f32 0.0, %v1391
  %1393 = vdwg.mxu0
  %v1394 = vsel %vm147, %v962, 0
  %1396 = vmatpush.msra.mxu0 0.0
  %1397 = vmatpush.msra.mxu0 0.0
  %1398 = vmatpush.msra.mxu0 0.0
  %1399 = vmatpush.msra.mxu0 0.0
  %1400 = vmatpush.msra.mxu0 0.0
  %1401 = vmatpush.msra.mxu0 0.0
  %1402 = vmatpush.msra.mxu0 0.0
  %1403 = vmatpush.msra.mxu0 0.0
  %1404 = vmatpush.msra.mxu0 0.0
  %1405 = vmatpush.msra.mxu0 0.0
  %1406 = vmatpush.msra.mxu0 0.0
  %1407 = vmatpush.msra.mxu0 0.0
  %1408 = vmatpush.msra.mxu0 0.0
  %1409 = vmatpush.msra.mxu0 0.0
  %1410 = vmatpush.msra.mxu0 0.0
  %1411 = vmatpush.msra.mxu0 %v1394
  %1412 = vmatmul.f32.gmra.mxu0 %v1369
  %v1413 = vpop.f32.mrf.mxu0
  %v1414 = vadd.f32 0.0, %v1413
  %1415 = vdwg.mxu0
  %v1417 = vsel %vm75, %v1414, 0
  %v1420 = vsel %vm147, %v1335, 0
  %1422 = vmatpush.msra.mxu0 0.0
  %1423 = vmatpush.msra.mxu0 0.0
  %1424 = vmatpush.msra.mxu0 0.0
  %1425 = vmatpush.msra.mxu0 0.0
  %1426 = vmatpush.msra.mxu0 0.0
  %1427 = vmatpush.msra.mxu0 0.0
  %1428 = vmatpush.msra.mxu0 0.0
  %1429 = vmatpush.msra.mxu0 0.0
  %1430 = vmatpush.msra.mxu0 0.0
  %1431 = vmatpush.msra.mxu0 0.0
  %1432 = vmatpush.msra.mxu0 0.0
  %1433 = vmatpush.msra.mxu0 0.0
  %1434 = vmatpush.msra.mxu0 0.0
  %1435 = vmatpush.msra.mxu0 0.0
  %1436 = vmatpush.msra.mxu0 0.0
  %1437 = vmatpush.msra.mxu0 %v1420
  %1438 = vmatmul.f32.gmra.mxu0 %v1417
  %v1439 = vpop.f32.mrf.mxu0
  %v1440 = vadd.f32 0.0, %v1439
  %1441 = vdwg.mxu0
  %v1442 = vsel %vm911, 0.0, %v1440
  %vm1443 = vcmask 9216
  %v1444 = vsel %vm1443, %v1442, 0.0
  %1445 = vadd.xlane.f32.xlu0 %v1444
  %v1446 = vpop.xlane.xlu0 %1445
  %v1447 = vadd.f32 %v1446, 1e-15
  %v1448 = vrsqrt.pop %v1447
  %v1449 = vmul.f32 %v1448, %v1447
  %v1450 = vmul.f32 %v1449, %v1448
  %v1451 = vmul.f32 0.5, %v1450
  %v1452 = vsub.f32 1.5, %v1451
  %v1453 = vmul.f32 %v1448, %v1452
  %vm1454 = vweird.f32 %v1447
  %vm1455 = vweird.f32 %v1448
  %vm1456 = vmor %vm1454, %vm1455
  %v1457 = vsel %vm1456, %v1448, %v1453
  %v1458 = vmul.f32 %v1442, %v1457
  %1459 = vxpose.xlu0.b32.start [1/16] %v1457, 128
  %1460 = vxpose.xlu0.b32.cont [2/16] 0.0, 128
  %1461 = vxpose.xlu0.b32.cont [3/16] 0.0, 128
  %1462 = vxpose.xlu0.b32.cont [4/16] 0.0, 128
  %1463 = vxpose.xlu0.b32.cont [5/16] 0.0, 128
  %1464 = vxpose.xlu0.b32.cont [6/16] 0.0, 128
  %1465 = vxpose.xlu0.b32.cont [7/16] 0.0, 128
  %1466 = vxpose.xlu0.b32.cont [8/16] 0.0, 128
  %1467 = vxpose.xlu0.b32.cont [9/16] 0.0, 128
  %1468 = vxpose.xlu0.b32.cont [10/16] 0.0, 128
  %1469 = vxpose.xlu0.b32.cont [11/16] 0.0, 128
  %1470 = vxpose.xlu0.b32.cont [12/16] 0.0, 128
  %1471 = vxpose.xlu0.b32.cont [13/16] 0.0, 128
  %1472 = vxpose.xlu0.b32.cont [14/16] 0.0, 128
  %1473 = vxpose.xlu0.b32.cont [15/16] 0.0, 128
  %1474 = vxpose.xlu0.b32.end [16/16] 0.0, 128
  %v1475 = vpop.trf.xlu0
  %v1476 = vpop.trf.xlu0
  %v1477 = vpop.trf.xlu0
  %v1478 = vpop.trf.xlu0
  %v1479 = vpop.trf.xlu0
  %v1480 = vpop.trf.xlu0
  %v1481 = vpop.trf.xlu0
  %v1482 = vpop.trf.xlu0
  %v1483 = vpop.trf.xlu0
  %v1484 = vpop.trf.xlu0
  %v1485 = vpop.trf.xlu0
  %v1486 = vpop.trf.xlu0
  %v1487 = vpop.trf.xlu0
  %v1488 = vpop.trf.xlu0
  %v1489 = vpop.trf.xlu0
  %v1490 = vpop.trf.xlu0
  %v1491 = vperm.slane %v1475, 0
  %v1492 = vmul.f32 %v1458, %v1491
  %v1494 = vsel %vm1311, %v1492, 0
  %vm1496 = vcmask 1041408
  %v1498 = vsel %vm1496, %v1392, 0
  %1500 = vmatpush.msra.mxu0 0.0
  %1501 = vmatpush.msra.mxu0 0.0
  %1502 = vmatpush.msra.mxu0 0.0
  %1503 = vmatpush.msra.mxu0 0.0
  %1504 = vmatpush.msra.mxu0 0.0
  %1505 = vmatpush.msra.mxu0 0.0
  %1506 = vmatpush.msra.mxu0 0.0
  %1507 = vmatpush.msra.mxu0 0.0
  %1508 = vmatpush.msra.mxu0 0.0
  %1509 = vmatpush.msra.mxu0 0.0
  %1510 = vmatpush.msra.mxu0 0.0
  %1511 = vmatpush.msra.mxu0 0.0
  %1512 = vmatpush.msra.mxu0 0.0
  %1513 = vmatpush.msra.mxu0 0.0
  %1514 = vmatpush.msra.mxu0 0.0
  %1515 = vmatpush.msra.mxu0 %v1498
  %1516 = vmatmul.f32.gmra.mxu0 %v1494
  %v1517 = vpop.f32.mrf.mxu0
  %v1518 = vadd.f32 0.0, %v1517
  %1519 = vdwg.mxu0
  %1520 = vrot.lane.b32.xlu0 %v1392, 8
  %v1521 = vpop.permute.xlu0 %1520
  %v1523 = vsel %vm174, %v1518, %v1521
  %v1525 = vperm.slane %v747, 0
  %v1528 = vsel %vm996, %v1523, 0
  %1530 = vmatpush.msra.mxu0 0.0
  %1531 = vmatpush.msra.mxu0 0.0
  %1532 = vmatpush.msra.mxu0 0.0
  %1533 = vmatpush.msra.mxu0 0.0
  %1534 = vmatpush.msra.mxu0 0.0
  %1535 = vmatpush.msra.mxu0 0.0
  %1536 = vmatpush.msra.mxu0 0.0
  %1537 = vmatpush.msra.mxu0 0.0
  %1538 = vmatpush.msra.mxu0 0.0
  %1539 = vmatpush.msra.mxu0 0.0
  %1540 = vmatpush.msra.mxu0 0.0
  %1541 = vmatpush.msra.mxu0 0.0
  %1542 = vmatpush.msra.mxu0 0.0
  %1543 = vmatpush.msra.mxu0 0.0
  %1544 = vmatpush.msra.mxu0 %v746
  %1545 = vmatpush.msra.mxu0 %v745
  %1546 = vmatmul.f32.gmra.mxu0 %v1528
  %v1547 = vpop.f32.mrf.mxu0
  %v1548 = vadd.f32 %v1525, %v1547
  %1549 = vdwg.mxu0
  %vm1550 = vcmask 58368
  %v1551 = vsel %vm1550, %v1548, 0.0
  %v1552 = vrot.slane %v1551, 4
  %v1553 = vadd.f32 %v1551, %v1552
  %v1554 = vrot.slane %v1553, 2
  %v1555 = vadd.f32 %v1553, %v1554
  %v1556 = vrot.slane %v1555, 1
  %v1557 = vadd.f32 %v1555, %v1556
  %v1558 = vrcp.pop 2.0
  %v1559 = vmul.f32 2.0, %v1558
  %v1560 = vsub.f32 1.0, %v1559
  %v1561 = vmul.f32 %v1558, %v1560
  %v1562 = vadd.f32 %v1558, %v1561
  %vm1563 = vweird.f32 %v1558
  %v1564 = vsel %vm1563, %v1558, %v1562
  %v1565 = vmul.f32 %v1557, %v1564
  %v1566 = vrot.slane %v1335, 4
  %1568 = vxpose.xlu0.b32.start [1/16] %v1566, 128
  %1569 = vxpose.xlu0.b32.cont [2/16] 0.0, 128
  %1570 = vxpose.xlu0.b32.cont [3/16] 0.0, 128
  %1571 = vxpose.xlu0.b32.cont [4/16] 0.0, 128
  %1572 = vxpose.xlu0.b32.cont [5/16] 0.0, 128
  %1573 = vxpose.xlu0.b32.cont [6/16] 0.0, 128
  %1574 = vxpose.xlu0.b32.cont [7/16] 0.0, 128
  %1575 = vxpose.xlu0.b32.cont [8/16] 0.0, 128
  %1576 = vxpose.xlu0.b32.cont [9/16] 0.0, 128
  %1577 = vxpose.xlu0.b32.cont [10/16] 0.0, 128
  %1578 = vxpose.xlu0.b32.cont [11/16] 0.0, 128
  %1579 = vxpose.xlu0.b32.cont [12/16] 0.0, 128
  %1580 = vxpose.xlu0.b32.cont [13/16] 0.0, 128
  %1581 = vxpose.xlu0.b32.cont [14/16] 0.0, 128
  %1582 = vxpose.xlu0.b32.cont [15/16] 0.0, 128
  %1583 = vxpose.xlu0.b32.end [16/16] 0.0, 128
  %v1584 = vpop.trf.xlu0
  %v1585 = vpop.trf.xlu0
  %v1586 = vpop.trf.xlu0
  %v1587 = vpop.trf.xlu0
  %v1588 = vpop.trf.xlu0
  %v1589 = vpop.trf.xlu0
  %v1590 = vpop.trf.xlu0
  %v1591 = vpop.trf.xlu0
  %v1592 = vpop.trf.xlu0
  %v1593 = vpop.trf.xlu0
  %v1594 = vpop.trf.xlu0
  %v1595 = vpop.trf.xlu0
  %v1596 = vpop.trf.xlu0
  %v1597 = vpop.trf.xlu0
  %v1598 = vpop.trf.xlu0
  %v1599 = vpop.trf.xlu0
  %v1601 = vsel %vm75, %v1584, 0
  %v1603 = vsel %vm147, %v1278, 0
  %1605 = vmatpush.msra.mxu0 0.0
  %1606 = vmatpush.msra.mxu0 0.0
  %1607 = vmatpush.msra.mxu0 0.0
  %1608 = vmatpush.msra.mxu0 0.0
  %1609 = vmatpush.msra.mxu0 0.0
  %1610 = vmatpush.msra.mxu0 0.0
  %1611 = vmatpush.msra.mxu0 0.0
  %1612 = vmatpush.msra.mxu0 0.0
  %1613 = vmatpush.msra.mxu0 0.0
  %1614 = vmatpush.msra.mxu0 0.0
  %1615 = vmatpush.msra.mxu0 0.0
  %1616 = vmatpush.msra.mxu0 0.0
  %1617 = vmatpush.msra.mxu0 0.0
  %1618 = vmatpush.msra.mxu0 0.0
  %1619 = vmatpush.msra.mxu0 0.0
  %1620 = vmatpush.msra.mxu0 %v1603
  %1621 = vmatmul.f32.gmra.mxu0 %v1601
  %v1622 = vpop.f32.mrf.mxu0
  %v1623 = vadd.f32 0.0, %v1622
  %1624 = vdwg.mxu0
  %v1625 = vsel %vm147, %v1224, 0
  %1627 = vmatpush.msra.mxu0 0.0
  %1628 = vmatpush.msra.mxu0 0.0
  %1629 = vmatpush.msra.mxu0 0.0
  %1630 = vmatpush.msra.mxu0 0.0
  %1631 = vmatpush.msra.mxu0 0.0
  %1632 = vmatpush.msra.mxu0 0.0
  %1633 = vmatpush.msra.mxu0 0.0
  %1634 = vmatpush.msra.mxu0 0.0
  %1635 = vmatpush.msra.mxu0 0.0
  %1636 = vmatpush.msra.mxu0 0.0
  %1637 = vmatpush.msra.mxu0 0.0
  %1638 = vmatpush.msra.mxu0 0.0
  %1639 = vmatpush.msra.mxu0 0.0
  %1640 = vmatpush.msra.mxu0 0.0
  %1641 = vmatpush.msra.mxu0 0.0
  %1642 = vmatpush.msra.mxu0 %v1625
  %1643 = vmatmul.f32.gmra.mxu0 %v1601
  %v1644 = vpop.f32.mrf.mxu0
  %v1645 = vadd.f32 0.0, %v1644
  %1646 = vdwg.mxu0
  %v1648 = vsel %vm75, %v1645, 0
  %v1650 = vsel %vm147, %v1566, 0
  %1652 = vmatpush.msra.mxu0 0.0
  %1653 = vmatpush.msra.mxu0 0.0
  %1654 = vmatpush.msra.mxu0 0.0
  %1655 = vmatpush.msra.mxu0 0.0
  %1656 = vmatpush.msra.mxu0 0.0
  %1657 = vmatpush.msra.mxu0 0.0
  %1658 = vmatpush.msra.mxu0 0.0
  %1659 = vmatpush.msra.mxu0 0.0
  %1660 = vmatpush.msra.mxu0 0.0
  %1661 = vmatpush.msra.mxu0 0.0
  %1662 = vmatpush.msra.mxu0 0.0
  %1663 = vmatpush.msra.mxu0 0.0
  %1664 = vmatpush.msra.mxu0 0.0
  %1665 = vmatpush.msra.mxu0 0.0
  %1666 = vmatpush.msra.mxu0 0.0
  %1667 = vmatpush.msra.mxu0 %v1650
  %1668 = vmatmul.f32.gmra.mxu0 %v1648
  %v1669 = vpop.f32.mrf.mxu0
  %v1670 = vadd.f32 0.0, %v1669
  %1671 = vdwg.mxu0
  %v1672 = vsel %vm911, 0.0, %v1670
  %v1673 = vsel %vm1443, %v1672, 0.0
  %1674 = vadd.xlane.f32.xlu0 %v1673
  %v1675 = vpop.xlane.xlu0 %1674
  %v1676 = vadd.f32 %v1675, 1e-15
  %v1677 = vrsqrt.pop %v1676
  %v1678 = vmul.f32 %v1677, %v1676
  %v1679 = vmul.f32 %v1678, %v1677
  %v1680 = vmul.f32 0.5, %v1679
  %v1681 = vsub.f32 1.5, %v1680
  %v1682 = vmul.f32 %v1677, %v1681
  %vm1683 = vweird.f32 %v1676
  %vm1684 = vweird.f32 %v1677
  %vm1685 = vmor %vm1683, %vm1684
  %v1686 = vsel %vm1685, %v1677, %v1682
  %v1687 = vmul.f32 %v1672, %v1686
  %1688 = vxpose.xlu0.b32.start [1/16] %v1686, 128
  %1689 = vxpose.xlu0.b32.cont [2/16] 0.0, 128
  %1690 = vxpose.xlu0.b32.cont [3/16] 0.0, 128
  %1691 = vxpose.xlu0.b32.cont [4/16] 0.0, 128
  %1692 = vxpose.xlu0.b32.cont [5/16] 0.0, 128
  %1693 = vxpose.xlu0.b32.cont [6/16] 0.0, 128
  %1694 = vxpose.xlu0.b32.cont [7/16] 0.0, 128
  %1695 = vxpose.xlu0.b32.cont [8/16] 0.0, 128
  %1696 = vxpose.xlu0.b32.cont [9/16] 0.0, 128
  %1697 = vxpose.xlu0.b32.cont [10/16] 0.0, 128
  %1698 = vxpose.xlu0.b32.cont [11/16] 0.0, 128
  %1699 = vxpose.xlu0.b32.cont [12/16] 0.0, 128
  %1700 = vxpose.xlu0.b32.cont [13/16] 0.0, 128
  %1701 = vxpose.xlu0.b32.cont [14/16] 0.0, 128
  %1702 = vxpose.xlu0.b32.cont [15/16] 0.0, 128
  %1703 = vxpose.xlu0.b32.end [16/16] 0.0, 128
  %v1704 = vpop.trf.xlu0
  %v1705 = vpop.trf.xlu0
  %v1706 = vpop.trf.xlu0
  %v1707 = vpop.trf.xlu0
  %v1708 = vpop.trf.xlu0
  %v1709 = vpop.trf.xlu0
  %v1710 = vpop.trf.xlu0
  %v1711 = vpop.trf.xlu0
  %v1712 = vpop.trf.xlu0
  %v1713 = vpop.trf.xlu0
  %v1714 = vpop.trf.xlu0
  %v1715 = vpop.trf.xlu0
  %v1716 = vpop.trf.xlu0
  %v1717 = vpop.trf.xlu0
  %v1718 = vpop.trf.xlu0
  %v1719 = vpop.trf.xlu0
  %v1720 = vperm.slane %v1704, 0
  %v1721 = vmul.f32 %v1687, %v1720
  %v1723 = vsel %vm1311, %v1721, 0
  %v1726 = vsel %vm1496, %v1623, 0
  %1728 = vmatpush.msra.mxu0 0.0
  %1729 = vmatpush.msra.mxu0 0.0
  %1730 = vmatpush.msra.mxu0 0.0
  %1731 = vmatpush.msra.mxu0 0.0
  %1732 = vmatpush.msra.mxu0 0.0
  %1733 = vmatpush.msra.mxu0 0.0
  %1734 = vmatpush.msra.mxu0 0.0
  %1735 = vmatpush.msra.mxu0 0.0
  %1736 = vmatpush.msra.mxu0 0.0
  %1737 = vmatpush.msra.mxu0 0.0
  %1738 = vmatpush.msra.mxu0 0.0
  %1739 = vmatpush.msra.mxu0 0.0
  %1740 = vmatpush.msra.mxu0 0.0
  %1741 = vmatpush.msra.mxu0 0.0
  %1742 = vmatpush.msra.mxu0 0.0
  %1743 = vmatpush.msra.mxu0 %v1726
  %1744 = vmatmul.f32.gmra.mxu0 %v1723
  %v1745 = vpop.f32.mrf.mxu0
  %v1746 = vadd.f32 0.0, %v1745
  %1747 = vdwg.mxu0
  %1748 = vrot.lane.b32.xlu0 %v1623, 8
  %v1749 = vpop.permute.xlu0 %1748
  %v1751 = vsel %vm174, %v1746, %v1749
  %v1753 = vsel %vm996, %v1751, 0
  %1755 = vmatpush.msra.mxu0 0.0
  %1756 = vmatpush.msra.mxu0 0.0
  %1757 = vmatpush.msra.mxu0 0.0
  %1758 = vmatpush.msra.mxu0 0.0
  %1759 = vmatpush.msra.mxu0 0.0
  %1760 = vmatpush.msra.mxu0 0.0
  %1761 = vmatpush.msra.mxu0 0.0
  %1762 = vmatpush.msra.mxu0 0.0
  %1763 = vmatpush.msra.mxu0 0.0
  %1764 = vmatpush.msra.mxu0 0.0
  %1765 = vmatpush.msra.mxu0 0.0
  %1766 = vmatpush.msra.mxu0 0.0
  %1767 = vmatpush.msra.mxu0 0.0
  %1768 = vmatpush.msra.mxu0 0.0
  %1769 = vmatpush.msra.mxu0 %v746
  %1770 = vmatpush.msra.mxu0 %v745
  %1771 = vmatmul.f32.gmra.mxu0 %v1753
  %v1772 = vpop.f32.mrf.mxu0
  %v1773 = vadd.f32 %v1525, %v1772
  %1774 = vdwg.mxu0
  %v1775 = vsel %vm1550, %v1773, 0.0
  %v1776 = vrot.slane %v1775, 4
  %v1777 = vadd.f32 %v1775, %v1776
  %v1778 = vrot.slane %v1777, 2
  %v1779 = vadd.f32 %v1777, %v1778
  %v1780 = vrot.slane %v1779, 1
  %v1781 = vadd.f32 %v1779, %v1780
  %v1782 = vmul.f32 %v1781, %v1564
  %vm1783 = vcmask 1040384
  %v1784 = vsel %vm1783, %v1565, %v1782
  %v1785 = vld [vmem:[%s18] sm:$0xff]
  %v1786 = vld [vmem:[%s19] sm:$0x1]
  %v1788 = vperm.slane %v1786, 0
  %v1791 = vsel %vm174, %v1784, 0
  %1793 = vmatpush.msra.mxu0 0.0
  %1794 = vmatpush.msra.mxu0 0.0
  %1795 = vmatpush.msra.mxu0 0.0
  %1796 = vmatpush.msra.mxu0 0.0
  %1797 = vmatpush.msra.mxu0 0.0
  %1798 = vmatpush.msra.mxu0 0.0
  %1799 = vmatpush.msra.mxu0 0.0
  %1800 = vmatpush.msra.mxu0 0.0
  %1801 = vmatpush.msra.mxu0 0.0
  %1802 = vmatpush.msra.mxu0 0.0
  %1803 = vmatpush.msra.mxu0 0.0
  %1804 = vmatpush.msra.mxu0 0.0
  %1805 = vmatpush.msra.mxu0 0.0
  %1806 = vmatpush.msra.mxu0 0.0
  %1807 = vmatpush.msra.mxu0 0.0
  %1808 = vmatpush.msra.mxu0 %v1785
  %1809 = vmatmul.f32.gmra.mxu0 %v1791
  %v1810 = vpop.f32.mrf.mxu0
  %v1811 = vadd.f32 %v1788, %v1810
  %1812 = vdwg.mxu0
  %v1813 = vmax.f32 %v1811, 0.0
  %v1814 = vld [vmem:[%s20] sm:$0xff]
  %v1815 = vld [vmem:[#allocation2] sm:$0x1]
  %v1817 = vperm.slane %v1815, 0
  %v1820 = vsel %vm174, %v1813, 0
  %1822 = vmatpush.msra.mxu0 0.0
  %1823 = vmatpush.msra.mxu0 0.0
  %1824 = vmatpush.msra.mxu0 0.0
  %1825 = vmatpush.msra.mxu0 0.0
  %1826 = vmatpush.msra.mxu0 0.0
  %1827 = vmatpush.msra.mxu0 0.0
  %1828 = vmatpush.msra.mxu0 0.0
  %1829 = vmatpush.msra.mxu0 0.0
  %1830 = vmatpush.msra.mxu0 0.0
  %1831 = vmatpush.msra.mxu0 0.0
  %1832 = vmatpush.msra.mxu0 0.0
  %1833 = vmatpush.msra.mxu0 0.0
  %1834 = vmatpush.msra.mxu0 0.0
  %1835 = vmatpush.msra.mxu0 0.0
  %1836 = vmatpush.msra.mxu0 0.0
  %1837 = vmatpush.msra.mxu0 %v1814
  %1838 = vmatmul.f32.gmra.mxu0 %v1820
  %v1839 = vpop.f32.mrf.mxu0
  %v1840 = vadd.f32 %v1817, %v1839
  %1841 = vdwg.mxu0
  %v1842 = vxor.u32 %v1840, 2147483648
  %v1843 = vmul.f32 %v1842, 1.442695
  %v1844 = vpow.pop %v1843
  %v1845 = vadd.f32 %v1844, 1.0
  %v1846 = vrcp.pop %v1845
  %v1847 = vmul.f32 %v1845, %v1846
  %v1848 = vsub.f32 1.0, %v1847
  %v1849 = vmul.f32 %v1846, %v1848
  %v1850 = vadd.f32 %v1846, %v1849
  %vm1851 = vweird.f32 %v1845
  %vm1852 = vweird.f32 %v1846
  %vm1853 = vmor %vm1851, %vm1852
  %v1854 = vsel %vm1853, %v1846, %v1850
  %v1855 = vand.u32 2147483647, %v1845
  %vm1856 = vcmp.eq.f32.partialorder %v1855, 8.507059e+37
  %v1857 = vand.u32 %v1845, 2147483648
  %v1858 = vor.u32 1.1754944e-38, %v1857
  %v1859 = vsel %vm1856, %v1858, %v1854
  %v1860 = vmul.f32 1.0, %v1859
  %vm1861 = vcmask 1024
  %1862 = vst.msk [vmem:[%s22] sm:$0x3] %vm1861, %v1860
  // Predicated region
  $region90: #{model_forward.1} parent=0 // pred_check
    _
  $region91: #{model_forward.1} parent=0 // pred_check_branch
    %1864 = sbr.rel (0) target = $region93
  $region92: #{model_forward.1} parent=0 // pred_region
    _
  $region93: #{model_forward.1} parent=0 // pred_fallthru
    _
  // Predicated region
  $region94: #{model_forward.1} parent=0 // pred_check
    _
  $region95: #{model_forward.1} parent=0 // pred_check_branch
    %1866 = sbr.rel (0) target = $region97
  $region96: #{model_forward.1} parent=0 // pred_region
    _
  $region97: #{model_forward.1} parent=0 // pred_fallthru
    _

</llo_original>
